<compile_context>
chip_gen: v7x
topology: tpu7x:2x2x1
jax: 0.10.0
libtpu: 0.0.40
codegen_flags: <defaults>
</compile_context>

<pallas_src>
import jax
import jax.numpy as jnp
from jax.experimental import pallas as pl
from jax.experimental.pallas import tpu as pltpu


def _round_up(x, m):
    return ((x + m - 1) // m) * m


def _vmem_cap_bytes():
    """Per-generation usable VMEM budget (3/4 of physical per-core capacity)."""
    phys = 64 * 1024 * 1024  # conservative fallback (v7x per-TC)
    try:
        info = pltpu.get_tpu_info()
        c = getattr(info, "vmem_capacity_bytes", None)
        if c:
            phys = int(c)
    except Exception:
        pass
    return (phys * 3) // 4


def ffn_kernel(x_ref, w1_ref, b1_ref, w2_ref, b2_ref, g_ref, beta_ref, o_ref, acc_ref):
    """One (token-tile i, hidden-chunk k) grid step.

    x_ref   : (tm, d_model) bf16  token tile (block index constant over k -> fetched once per i)
    w1_ref  : (d_model, th) bf16  fc1 weight chunk (streamed over k)
    b1_ref  : (1, th)       f32   fc1 bias chunk
    w2_ref  : (th, d_model) bf16  fc2 weight chunk (streamed over k)
    b2/g/beta: (1, d_model) f32   grid-invariant
    o_ref   : (tm, d_model)       output tile, written on last k only
    acc_ref : (tm, d_model) f32   VMEM accumulator (residual + fc2 partial sums)
    """
    k = pl.program_id(1)
    x_bf = x_ref[...]

    @pl.when(k == 0)
    def _():
        # Initialize with the residual stream and the (once-only) fc2 bias, in f32.
        acc_ref[...] = x_bf.astype(jnp.float32) + b2_ref[...]

    # fc1 chunk + relu (bf16 MXU matmul, f32 accumulation)
    h = jnp.dot(x_bf, w1_ref[...], preferred_element_type=jnp.float32) + b1_ref[...]
    h = jnp.maximum(h, 0.0)

    # fc2 chunk, accumulated into the resident f32 accumulator.
    acc_ref[...] += jnp.dot(h.astype(jnp.bfloat16), w2_ref[...],
                            preferred_element_type=jnp.float32)

    # TODO(synk): dropout omitted (identity in eval mode); training-mode dropout would
    # use pltpu.prng_seed / pltpu.stateful_bernoulli on the fc2 output before the residual.

    @pl.when(k == pl.num_programs(1) - 1)
    def _():
        # LayerNorm over d_model, eps = 1e-5 (PyTorch default), f32 epilogue.
        y = acc_ref[...]
        mean = jnp.mean(y, axis=-1, keepdims=True)
        c = y - mean
        var = jnp.mean(c * c, axis=-1, keepdims=True)
        inv = jax.lax.rsqrt(var + 1e-5)
        o_ref[...] = (c * inv * g_ref[...] + beta_ref[...]).astype(o_ref.dtype)


def position_wise_feed_forward(x, w1, b1, w2, b2, gamma, beta, *, tm=512, th_max=2048):
    """x: [batch, seq, d_model] -> [batch, seq, d_model].

    Weights are pre-transposed: w1 [d_model, hidden], w2 [hidden, d_model].
    d_model multiples of 128 give lane-dense (unmasked) stores; other sizes work.
    """
    batch, seq, d_model = x.shape
    hidden = w1.shape[1]
    n_tok = batch * seq
    out_dtype = x.dtype
    bf16b, f32b = 2, 4

    # ---- token tiling: pad to tm, and to an even tile count (2-TC megacore balance) ----
    n_tiles = pl.cdiv(n_tok, tm)
    if n_tiles > 1 and n_tiles % 2:
        n_tiles += 1
    n_rows = n_tiles * tm

    x2 = x.reshape(n_tok, d_model).astype(jnp.bfloat16)      # bf16 activation streaming
    if n_rows != n_tok:
        x2 = jnp.pad(x2, ((0, n_rows - n_tok), (0, 0)))

    # ---- hidden chunking: MXU-aligned (mult. of 256), weight-chunk VMEM ~<=16 MiB ----
    th_budget_elems = (16 * 1024 * 1024) // (8 * d_model)     # 2 weights * 2 bufs * bf16
    th = max(256, min(th_max, (th_budget_elems // 256) * 256))
    th = min(th, _round_up(hidden, 256))
    hidden_p = _round_up(hidden, th)
    n_k = hidden_p // th

    # bf16 weights for the MXU, zero-padded along hidden (zero cols/rows contribute 0).
    w1_bf = jnp.pad(w1.astype(jnp.bfloat16), ((0, 0), (0, hidden_p - hidden)))
    w2_bf = jnp.pad(w2.astype(jnp.bfloat16), ((0, hidden_p - hidden), (0, 0)))
    b1_2 = jnp.pad(b1.astype(jnp.float32), (0, hidden_p - hidden)).reshape(1, hidden_p)
    b2_2 = b2.reshape(1, d_model).astype(jnp.float32)
    g2 = gamma.reshape(1, d_model).astype(jnp.float32)
    be2 = beta.reshape(1, d_model).astype(jnp.float32)

    # Grid-invariant blocks -> single buffer (no re-fetch, save VMEM).
    def const_spec(shape):
        return pl.BlockSpec(shape, lambda i, k: (0, 0), pipeline_mode=pl.Buffered(1))

    # ---- VMEM budget: 2x the estimated working set, clamped to a per-generation cap ----
    need = (2 * tm * d_model * bf16b          # x tile, double-buffered
            + 2 * tm * d_model * f32b         # out tile, double-buffered
            + tm * d_model * f32b             # f32 accumulator scratch
            + 2 * 2 * d_model * th * bf16b    # W1 + W2 chunks, double-buffered
            + 2 * th * f32b                   # b1 chunk, double-buffered
            + 3 * d_model * f32b              # b2 / gamma / beta
            + tm * th * (f32b + bf16b))       # fc1 intermediate (+ bf16 cast copy)
    vmem_limit = int(min(max(2 * need, 32 * 1024 * 1024), _vmem_cap_bytes()))

    # Honest cost estimate: weights are re-streamed once per token tile.
    cost = pl.CostEstimate(
        flops=4 * n_rows * d_model * hidden_p,                    # 2 matmuls, 2*M*N*K each
        transcendentals=n_rows,                                   # one rsqrt per token row
        bytes_accessed=(n_rows * d_model * (bf16b + f32b)         # x in (bf16) + out (f32)
                        + n_tiles * (2 * d_model * hidden_p * bf16b   # W1 + W2 per tile
                                     + hidden_p * f32b)               # b1 per tile
                        + 3 * d_model * f32b),                        # b2 / gamma / beta
    )

    out = pl.pallas_call(
        ffn_kernel,
        out_shape=jax.ShapeDtypeStruct((n_rows, d_model), out_dtype),
        grid_spec=pltpu.PrefetchScalarGridSpec(
            num_scalar_prefetch=0,
            grid=(n_tiles, n_k),
            in_specs=[
                pl.BlockSpec((tm, d_model), lambda i, k: (i, 0)),   # x tile (bf16)
                pl.BlockSpec((d_model, th), lambda i, k: (0, k)),   # W1 chunk (bf16)
                pl.BlockSpec((1, th),       lambda i, k: (0, k)),   # b1 chunk
                pl.BlockSpec((th, d_model), lambda i, k: (k, 0)),   # W2 chunk (bf16)
                const_spec((1, d_model)),                           # b2
                const_spec((1, d_model)),                           # gamma
                const_spec((1, d_model)),                           # beta
            ],
            out_specs=pl.BlockSpec((tm, d_model), lambda i, k: (i, 0)),
            scratch_shapes=[pltpu.VMEM((tm, d_model), jnp.float32)],
        ),
        compiler_params=pltpu.CompilerParams(
            dimension_semantics=("parallel", "arbitrary"),          # tokens parallel, hidden reduce
            vmem_limit_bytes=vmem_limit,
        ),
        cost_estimate=cost,
    )(x2, w1_bf, b1_2, w2_bf, b2_2, g2, be2)

    return out[:n_tok].reshape(batch, seq, d_model)


if __name__ == "__main__":
    # Small but lane-dense shapes (d_model, hidden multiples of 128); n_tok = 512 = 2 tiles.
    batch, seq, d_model, hidden = 2, 256, 128, 512

    key = jax.random.PRNGKey(0)
    kx, k1, k2, k3, k4 = jax.random.split(key, 5)

    x = jax.random.normal(kx, (batch, seq, d_model), dtype=jnp.float32)

    # Deterministic parameter init (PyTorch-Linear-style uniform bounds).
    bound1 = 1.0 / (d_model ** 0.5)
    bound2 = 1.0 / (hidden ** 0.5)
    w1 = jax.random.uniform(k1, (d_model, hidden), jnp.float32, -bound1, bound1)  # fc1.weight.T
    b1 = jax.random.uniform(k2, (hidden,), jnp.float32, -bound1, bound1)
    w2 = jax.random.uniform(k3, (hidden, d_model), jnp.float32, -bound2, bound2)  # fc2.weight.T
    b2 = jax.random.uniform(k4, (d_model,), jnp.float32, -bound2, bound2)
    gamma = jnp.ones((d_model,), jnp.float32)   # LayerNorm weight
    beta = jnp.zeros((d_model,), jnp.float32)   # LayerNorm bias

    out = position_wise_feed_forward(x, w1, b1, w2, b2, gamma, beta, tm=256)
    out = jax.block_until_ready(out)

    # Pure-JAX reference with matching numerics: bf16 activations/weights on the matmuls
    # and the residual, f32 accumulation and LayerNorm.
    xb = x.reshape(-1, d_model).astype(jnp.bfloat16)
    h = jnp.maximum(
        jnp.dot(xb, w1.astype(jnp.bfloat16), preferred_element_type=jnp.float32) + b1, 0.0)
    y = (jnp.dot(h.astype(jnp.bfloat16), w2.astype(jnp.bfloat16),
                 preferred_element_type=jnp.float32) + b2 + xb.astype(jnp.float32))
    mu = y.mean(-1, keepdims=True)
    var = ((y - mu) ** 2).mean(-1, keepdims=True)
    ref = ((y - mu) * jax.lax.rsqrt(var + 1e-5)) * gamma + beta
    ref = ref.reshape(batch, seq, d_model)

    assert jnp.allclose(out, ref, atol=2e-3, rtol=2e-3), "mismatch vs reference"
    print("KERNEL_OK")
</pallas_src>

<mosaic_0001>
module attributes {stable_mosaic.version = 11 : i64} {
  func.func @ffn_kernel(%arg0: i32, %arg1: i32, %arg2: memref<256x128xbf16, #tpu.memory_space<vmem>>, %arg3: memref<128x512xbf16, #tpu.memory_space<vmem>>, %arg4: memref<1x512xf32, #tpu.memory_space<vmem>>, %arg5: memref<512x128xbf16, #tpu.memory_space<vmem>>, %arg6: memref<1x128xf32, #tpu.memory_space<vmem>>, %arg7: memref<1x128xf32, #tpu.memory_space<vmem>>, %arg8: memref<1x128xf32, #tpu.memory_space<vmem>>, %arg9: memref<256x128xf32, #tpu.memory_space<vmem>>, %arg10: memref<256x128xf32, #tpu.memory_space<vmem>>) attributes {dimension_semantics = [#tpu.dimension_semantics<parallel>, #tpu.dimension_semantics<arbitrary>], iteration_bounds = array<i64: 2, 1>, scalar_prefetch = 0 : i64, scratch_operands = 1 : i64, tpu.core_type = #tpu.core_type<tc>, window_params = [{transform_indices = @transform_0, window_bounds = array<i64: 256, 128>}, {transform_indices = @transform_1, window_bounds = array<i64: 128, 512>}, {transform_indices = @transform_2, window_bounds = array<i64: 1, 512>}, {transform_indices = @transform_3, window_bounds = array<i64: 512, 128>}, {pipeline_mode = #tpu.pipeline_mode<synchronous>, transform_indices = @transform_4, window_bounds = array<i64: 1, 128>}, {pipeline_mode = #tpu.pipeline_mode<synchronous>, transform_indices = @transform_5, window_bounds = array<i64: 1, 128>}, {pipeline_mode = #tpu.pipeline_mode<synchronous>, transform_indices = @transform_6, window_bounds = array<i64: 1, 128>}, {transform_indices = @transform_7, window_bounds = array<i64: 256, 128>}]} {
    %c0 = arith.constant 0 : index
    %c0_0 = arith.constant 0 : index
    %0 = vector.load %arg2[%c0, %c0_0] : memref<256x128xbf16, #tpu.memory_space<vmem>>, vector<256x128xbf16>
    %c0_i32 = arith.constant 0 : i32
    %1 = arith.cmpi eq, %arg1, %c0_i32 : i32
    %2 = arith.extui %1 : i1 to i32
    %c0_i32_1 = arith.constant 0 : i32
    %3 = arith.cmpi ne, %2, %c0_i32_1 : i32
    scf.if %3 {
      %20 = arith.extf %0 : vector<256x128xbf16> to vector<256x128xf32>
      %c0_16 = arith.constant 0 : index
      %c0_17 = arith.constant 0 : index
      %21 = vector.load %arg6[%c0_16, %c0_17] : memref<1x128xf32, #tpu.memory_space<vmem>>, vector<1x128xf32>
      %22 = vector.broadcast %21 : vector<1x128xf32> to vector<256x128xf32>
      %23 = arith.addf %20, %22 : vector<256x128xf32>
      %c0_18 = arith.constant 0 : index
      %c0_19 = arith.constant 0 : index
      %24 = vector.load %arg10[%c0_18, %c0_19] : memref<256x128xf32, #tpu.memory_space<vmem>>, vector<256x128xf32>
      tpu.vector_store %arg10[%c0_18, %c0_19], %23 {strides = array<i32>} : memref<256x128xf32, #tpu.memory_space<vmem>>, vector<256x128xf32>,
    } else {
    }
    %c0_2 = arith.constant 0 : index
    %c0_3 = arith.constant 0 : index
    %4 = vector.load %arg3[%c0_2, %c0_3] : memref<128x512xbf16, #tpu.memory_space<vmem>>, vector<128x512xbf16>
    %cst = arith.constant dense<0.000000e+00> : vector<256x512xf32>
    %5 = tpu.matmul %0, %4, %cst {dimension_numbers = #tpu.dot_dimension_numbers<[1], [0], [0], [1], [0, 0, 1, 1], [], []>} : vector<256x128xbf16>, vector<128x512xbf16>, vector<256x512xf32> -> vector<256x512xf32>
    %c0_4 = arith.constant 0 : index
    %c0_5 = arith.constant 0 : index
    %6 = vector.load %arg4[%c0_4, %c0_5] : memref<1x512xf32, #tpu.memory_space<vmem>>, vector<1x512xf32>
    %7 = vector.broadcast %6 : vector<1x512xf32> to vector<256x512xf32>
    %8 = arith.addf %5, %7 : vector<256x512xf32>
    %cst_6 = arith.constant 0.000000e+00 : f32
    %9 = vector.broadcast %cst_6 : f32 to vector<256x512xf32>
    %10 = arith.maximumf %8, %9 : vector<256x512xf32>
    %c0_7 = arith.constant 0 : index
    %c0_8 = arith.constant 0 : index
    %11 = vector.load %arg10[%c0_7, %c0_8] : memref<256x128xf32, #tpu.memory_space<vmem>>, vector<256x128xf32>
    %12 = arith.truncf %10 : vector<256x512xf32> to vector<256x512xbf16>
    %c0_9 = arith.constant 0 : index
    %c0_10 = arith.constant 0 : index
    %13 = vector.load %arg5[%c0_9, %c0_10] : memref<512x128xbf16, #tpu.memory_space<vmem>>, vector<512x128xbf16>
    %cst_11 = arith.constant dense<0.000000e+00> : vector<256x128xf32>
    %14 = tpu.matmul %12, %13, %cst_11 {dimension_numbers = #tpu.dot_dimension_numbers<[1], [0], [0], [1], [0, 0, 1, 1], [], []>} : vector<256x512xbf16>, vector<512x128xbf16>, vector<256x128xf32> -> vector<256x128xf32>
    %15 = arith.addf %11, %14 : vector<256x128xf32>
    %c0_12 = arith.constant 0 : index
    %c0_13 = arith.constant 0 : index
    %16 = vector.load %arg10[%c0_12, %c0_13] : memref<256x128xf32, #tpu.memory_space<vmem>>, vector<256x128xf32>
    tpu.vector_store %arg10[%c0_12, %c0_13], %15 {strides = array<i32>} : memref<256x128xf32, #tpu.memory_space<vmem>>, vector<256x128xf32>,
    %c0_i32_14 = arith.constant 0 : i32
    %17 = arith.cmpi eq, %arg1, %c0_i32_14 : i32
    %18 = arith.extui %17 : i1 to i32
    %c0_i32_15 = arith.constant 0 : i32
    %19 = arith.cmpi ne, %18, %c0_i32_15 : i32
    scf.if %19 {
      %c0_16 = arith.constant 0 : index
      %c0_17 = arith.constant 0 : index
      %20 = vector.load %arg10[%c0_16, %c0_17] : memref<256x128xf32, #tpu.memory_space<vmem>>, vector<256x128xf32>
      %cst_18 = arith.constant dense<0.000000e+00> : vector<256xf32>
      %21 = vector.multi_reduction <add>, %20, %cst_18 [1] : vector<256x128xf32> to vector<256xf32>
      %22 = vector.shape_cast %21 : vector<256xf32> to vector<256x1xf32>
      %cst_19 = arith.constant 1.280000e+02 : f32
      %23 = vector.broadcast %cst_19 : f32 to vector<256x1xf32>
      %24 = arith.divf %22, %23 : vector<256x1xf32>
      %25 = vector.broadcast %24 : vector<256x1xf32> to vector<256x128xf32>
      %26 = arith.subf %20, %25 : vector<256x128xf32>
      %27 = arith.mulf %26, %26 : vector<256x128xf32>
      %cst_20 = arith.constant dense<0.000000e+00> : vector<256xf32>
      %28 = vector.multi_reduction <add>, %27, %cst_20 [1] : vector<256x128xf32> to vector<256xf32>
      %29 = vector.shape_cast %28 : vector<256xf32> to vector<256x1xf32>
      %cst_21 = arith.constant 1.280000e+02 : f32
      %30 = vector.broadcast %cst_21 : f32 to vector<256x1xf32>
      %31 = arith.divf %29, %30 : vector<256x1xf32>
      %cst_22 = arith.constant 9.99999974E-6 : f32
      %32 = vector.broadcast %cst_22 : f32 to vector<256x1xf32>
      %33 = arith.addf %31, %32 : vector<256x1xf32>
      %34 = math.rsqrt %33 : vector<256x1xf32>
      %35 = vector.broadcast %34 : vector<256x1xf32> to vector<256x128xf32>
      %36 = arith.mulf %26, %35 : vector<256x128xf32>
      %c0_23 = arith.constant 0 : index
      %c0_24 = arith.constant 0 : index
      %37 = vector.load %arg7[%c0_23, %c0_24] : memref<1x128xf32, #tpu.memory_space<vmem>>, vector<1x128xf32>
      %38 = vector.broadcast %37 : vector<1x128xf32> to vector<256x128xf32>
      %39 = arith.mulf %36, %38 : vector<256x128xf32>
      %c0_25 = arith.constant 0 : index
      %c0_26 = arith.constant 0 : index
      %40 = vector.load %arg8[%c0_25, %c0_26] : memref<1x128xf32, #tpu.memory_space<vmem>>, vector<1x128xf32>
      %41 = vector.broadcast %40 : vector<1x128xf32> to vector<256x128xf32>
      %42 = arith.addf %39, %41 : vector<256x128xf32>
      %c0_27 = arith.constant 0 : index
      %c0_28 = arith.constant 0 : index
      %43 = vector.load %arg9[%c0_27, %c0_28] : memref<256x128xf32, #tpu.memory_space<vmem>>, vector<256x128xf32>
      tpu.vector_store %arg9[%c0_27, %c0_28], %42 {strides = array<i32>} : memref<256x128xf32, #tpu.memory_space<vmem>>, vector<256x128xf32>,
    } else {
    }
    return
  }
  func.func @transform_0(%arg0: i32, %arg1: i32) -> (i32, i32) {
    %c0_i32 = arith.constant 0 : i32
    %c0_i32_0 = arith.constant 0 : i32
    return %arg0, %c0_i32 : i32, i32
  }
  func.func @transform_1(%arg0: i32, %arg1: i32) -> (i32, i32) {
    %c0_i32 = arith.constant 0 : i32
    %c0_i32_0 = arith.constant 0 : i32
    return %c0_i32, %arg1 : i32, i32
  }
  func.func @transform_2(%arg0: i32, %arg1: i32) -> (i32, i32) {
    %c0_i32 = arith.constant 0 : i32
    %c0_i32_0 = arith.constant 0 : i32
    return %c0_i32, %arg1 : i32, i32
  }
  func.func @transform_3(%arg0: i32, %arg1: i32) -> (i32, i32) {
    %c0_i32 = arith.constant 0 : i32
    %c0_i32_0 = arith.constant 0 : i32
    return %arg1, %c0_i32 : i32, i32
  }
  func.func @transform_4(%arg0: i32, %arg1: i32) -> (i32, i32) {
    %c0_i32 = arith.constant 0 : i32
    %c0_i32_0 = arith.constant 0 : i32
    %c0_i32_1 = arith.constant 0 : i32
    return %c0_i32, %c0_i32_0 : i32, i32
  }
  func.func @transform_5(%arg0: i32, %arg1: i32) -> (i32, i32) {
    %c0_i32 = arith.constant 0 : i32
    %c0_i32_0 = arith.constant 0 : i32
    %c0_i32_1 = arith.constant 0 : i32
    return %c0_i32, %c0_i32_0 : i32, i32
  }
  func.func @transform_6(%arg0: i32, %arg1: i32) -> (i32, i32) {
    %c0_i32 = arith.constant 0 : i32
    %c0_i32_0 = arith.constant 0 : i32
    %c0_i32_1 = arith.constant 0 : i32
    return %c0_i32, %c0_i32_0 : i32, i32
  }
  func.func @transform_7(%arg0: i32, %arg1: i32) -> (i32, i32) {
    %c0_i32 = arith.constant 0 : i32
    %c0_i32_0 = arith.constant 0 : i32
    return %arg0, %c0_i32 : i32, i32
  }
}

</mosaic_0001>

<llo_original>
// kernel: tpu_custom_call.1
$region0: #{tpu_custom_call.1}
  #allocation0 [shape = 'u32[]', space=smem, size = 0x4, offset = 0x4, fixed_abs, tag = 'smem constant byte address 0x4 - core index']
  #allocation1 [shape = 'u32[144,128]{1,0:T(1,128)}', space=vmem, size = 0x12000, scoped, tag = 'internal scratch']
  #allocation2 [shape = 'f32[256,128]{1,0:T(8,128)}', space=vmem, size = 0x20000, scoped, tag = 'scratch operand']
  %s0 = inlined_call_operand.hbm [shape: bf16[512,128], index: 0, kind: input, shape index: {}]
  %s1 = inlined_call_operand.hbm [shape: bf16[128,512], index: 1, kind: input, shape index: {}]
  %s2 = inlined_call_operand.vmem [shape: f32[1,512], index: 2, kind: input, shape index: {}]
  %s3 = inlined_call_operand.hbm [shape: bf16[512,128], index: 3, kind: input, shape index: {}]
  %s4 = inlined_call_operand.vmem [shape: f32[1,128], index: 4, kind: input, shape index: {}]
  %s5 = inlined_call_operand.vmem [shape: f32[1,128], index: 5, kind: input, shape index: {}]
  %s6 = inlined_call_operand.vmem [shape: f32[1,128], index: 6, kind: input, shape index: {}]
  %s7 = inlined_call_operand.hbm [shape: f32[512,128], index: 7, kind: output, shape index: {}]
  %s8 = sld [smem:[#allocation0]]
  $region81: #{tpu_custom_call.1} parent=0
    _
  %s10 = ssub.s32 1, %s8
  %s11 = scalar_select 0, %s10, %s8
  $region1: #{tpu_custom_call.1} parent=0
    #allocation3 [shape = 'u8[131072]{0}', space=vmem, size = 0x20000, scoped, tag = 'input window, operand 0']
    #allocation4 [shape = 's32[2]{0}', space=sflag, size = 0x8, scoped, tag = 'scoped memory for tpu_custom_call.1']
    #allocation5 [shape = 's32[2]{0}', space=sflag, size = 0x8, scoped, tag = 'scoped memory for tpu_custom_call.1']
    #allocation6 [shape = 'u8[131072]{0}', space=vmem, size = 0x20000, scoped, tag = 'input window, operand 1, single buffered']
    #allocation7 [shape = 's32[1]{0}', space=sflag, size = 0x4, scoped, tag = 'scoped memory for tpu_custom_call.1']
    #allocation8 [shape = 'u8[131072]{0}', space=vmem, size = 0x20000, scoped, tag = 'input window, operand 3, single buffered']
    #allocation9 [shape = 'u8[262144]{0}', space=vmem, size = 0x40000, scoped, tag = 'output window, operand 0']
    %12 = vsyncpa [#allocation4], 0
    %s13 = scalar_lea.sflag [#allocation4], 1
    %14 = vsyncpa %s13, 0
    %15 = vsyncpa [#allocation7], 0
    %16 = vsyncpa [#allocation5], 0
    %s17 = scalar_lea.sflag [#allocation5], 1
    %18 = vsyncpa %s17, 0
    loop: start=0, step=1, limit=4
    $region2: #{tpu_custom_call.1} parent=1 // loop_pre_header
      _
    $region3: #{tpu_custom_call.1} parent=1 // loop_header
      %s20 = sphi 0, %s24
      %p21 = scmp.ge.s32.totalorder %s20, 4
      %s27 = sphi 0, %s39
      %s28 = sphi 0, %s35
      %s29 = sphi 0, %s27
      %s30 = sphi 0, %s28
      %s31 = sphi 0, %s29
      %s32 = sphi 0, %s30
      %s42 = sphi 0, %s44
      %s45 = sphi 0, %s42
      %s46 = sphi 0, %s45
      %s62 = sphi 0, %s46
      %s68 = sphi 0, %s70
      %s71 = sphi 0, %s68
      %s72 = sphi 0, %s71
      %s88 = sphi 0, %s72
      %s94 = sphi 0, %s96
      %s97 = sphi 0, %s94
      %s98 = sphi 0, %s97
      %s114 = sphi 0, %s98
      %s120 = sphi 0, %s122
      %s123 = sphi 0, %s120
      %s124 = sphi 0, %s123
      %s140 = sphi 0, %s124
      %s144 = sphi 0, %s144
      %s146 = sphi 0, %s144
      %s147 = sphi 0, %s146
      %s161 = sphi 0, %s147
      %s165 = sphi 0, %s165
      %s167 = sphi 0, %s165
      %s168 = sphi 0, %s167
      %s182 = sphi 0, %s168
      %s186 = sphi 0, %s186
      %s188 = sphi 0, %s186
      %s189 = sphi 0, %s188
      %s203 = sphi 0, %s189
      %s209 = sphi 0, %s211
      %s212 = sphi 0, %s209
      %s213 = sphi 0, %s212
      %s229 = sphi 0, %s213
    $region4: #{tpu_custom_call.1} parent=1 // loop_header_branch
      %23 = sbr.rel (%p21) target = $region8
    $region5: #{tpu_custom_call.1} parent=1 // loop_body
      %s25 = ssub.s32 %s20, 1
      %s26 = ssub.s32 %s20, 2
      %s33 = sadd.s32 1, %s28
      %p34 = scmp.ge.s32.totalorder %s33, 1
      %s35 = scalar_select %p34, 0, %s33
      %s36 = sadd.s32 1, %s27
      %s37 = scalar_select %p34, %s36, %s27
      %p38 = scmp.ge.s32.totalorder %s37, 2
      %s39 = scalar_select %p38, 0, %s37
      %s40 = ssub.s32 %s27, %s39
      %p41 = scmp.eq.s32.totalorder %s40, 0
      %s43 = sadd.s32 %s42, 1
      %s44 = scalar_select %p41, %s42, %s43
      %p47 = pneg %p41
      %p48 = scmp.eq.s32.totalorder %s20, 1
      %p49 = por %p47, %p48
      %p50 = scmp.ne.s32.totalorder %s42, %s45
      %p51 = scmp.eq.s32.totalorder %s20, 0
      %p52 = por %p50, %p51
      %p53 = scmp.ne.s32.totalorder %s42, %s45
      %p54 = scmp.eq.s32.totalorder %s25, 1
      %p55 = por %p53, %p54
      %p56 = scmp.ne.s32.totalorder %s45, %s46
      %p57 = scmp.eq.s32.totalorder %s25, 0
      %p58 = por %p56, %p57
      %p59 = scmp.ne.s32.totalorder %s45, %s46
      %p60 = scmp.eq.s32.totalorder %s26, 1
      %p61 = por %p59, %p60
      %p63 = scmp.ne.s32.totalorder %s46, %s62
      %p64 = scmp.eq.s32.totalorder %s26, 0
      %p65 = por %p63, %p64
      %s66 = ssub.s32 %s28, %s35
      %p67 = scmp.eq.s32.totalorder %s66, 0
      %s69 = sadd.s32 %s68, 1
      %s70 = scalar_select %p67, %s68, %s69
      %p73 = pneg %p67
      %p74 = scmp.eq.s32.totalorder %s20, 1
      %p75 = por %p73, %p74
      %p76 = scmp.ne.s32.totalorder %s68, %s71
      %p77 = scmp.eq.s32.totalorder %s20, 0
      %p78 = por %p76, %p77
      %p79 = scmp.ne.s32.totalorder %s68, %s71
      %p80 = scmp.eq.s32.totalorder %s25, 1
      %p81 = por %p79, %p80
      %p82 = scmp.ne.s32.totalorder %s71, %s72
      %p83 = scmp.eq.s32.totalorder %s25, 0
      %p84 = por %p82, %p83
      %p85 = scmp.ne.s32.totalorder %s71, %s72
      %p86 = scmp.eq.s32.totalorder %s26, 1
      %p87 = por %p85, %p86
      %p89 = scmp.ne.s32.totalorder %s72, %s88
      %p90 = scmp.eq.s32.totalorder %s26, 0
      %p91 = por %p89, %p90
      %s92 = ssub.s32 %s28, %s35
      %p93 = scmp.eq.s32.totalorder %s92, 0
      %s95 = sadd.s32 %s94, 1
      %s96 = scalar_select %p93, %s94, %s95
      %p99 = pneg %p93
      %p100 = scmp.eq.s32.totalorder %s20, 1
      %p101 = por %p99, %p100
      %p102 = scmp.ne.s32.totalorder %s94, %s97
      %p103 = scmp.eq.s32.totalorder %s20, 0
      %p104 = por %p102, %p103
      %p105 = scmp.ne.s32.totalorder %s94, %s97
      %p106 = scmp.eq.s32.totalorder %s25, 1
      %p107 = por %p105, %p106
      %p108 = scmp.ne.s32.totalorder %s97, %s98
      %p109 = scmp.eq.s32.totalorder %s25, 0
      %p110 = por %p108, %p109
      %p111 = scmp.ne.s32.totalorder %s97, %s98
      %p112 = scmp.eq.s32.totalorder %s26, 1
      %p113 = por %p111, %p112
      %p115 = scmp.ne.s32.totalorder %s98, %s114
      %p116 = scmp.eq.s32.totalorder %s26, 0
      %p117 = por %p115, %p116
      %s118 = ssub.s32 %s28, %s35
      %p119 = scmp.eq.s32.totalorder %s118, 0
      %s121 = sadd.s32 %s120, 1
      %s122 = scalar_select %p119, %s120, %s121
      %p125 = pneg %p119
      %p126 = scmp.eq.s32.totalorder %s20, 1
      %p127 = por %p125, %p126
      %p128 = scmp.ne.s32.totalorder %s120, %s123
      %p129 = scmp.eq.s32.totalorder %s20, 0
      %p130 = por %p128, %p129
      %p131 = scmp.ne.s32.totalorder %s120, %s123
      %p132 = scmp.eq.s32.totalorder %s25, 1
      %p133 = por %p131, %p132
      %p134 = scmp.ne.s32.totalorder %s123, %s124
      %p135 = scmp.eq.s32.totalorder %s25, 0
      %p136 = por %p134, %p135
      %p137 = scmp.ne.s32.totalorder %s123, %s124
      %p138 = scmp.eq.s32.totalorder %s26, 1
      %p139 = por %p137, %p138
      %p141 = scmp.ne.s32.totalorder %s124, %s140
      %p142 = scmp.eq.s32.totalorder %s26, 0
      %p143 = por %p141, %p142
      %s145 = sadd.s32 %s144, 1
      %p148 = scmp.eq.s32.totalorder %s20, 1
      %p149 = scmp.ne.s32.totalorder %s144, %s146
      %p150 = scmp.eq.s32.totalorder %s20, 0
      %p151 = por %p149, %p150
      %p152 = scmp.ne.s32.totalorder %s144, %s146
      %p153 = scmp.eq.s32.totalorder %s25, 1
      %p154 = por %p152, %p153
      %p155 = scmp.ne.s32.totalorder %s146, %s147
      %p156 = scmp.eq.s32.totalorder %s25, 0
      %p157 = por %p155, %p156
      %p158 = scmp.ne.s32.totalorder %s146, %s147
      %p159 = scmp.eq.s32.totalorder %s26, 1
      %p160 = por %p158, %p159
      %p162 = scmp.ne.s32.totalorder %s147, %s161
      %p163 = scmp.eq.s32.totalorder %s26, 0
      %p164 = por %p162, %p163
      %s166 = sadd.s32 %s165, 1
      %p169 = scmp.eq.s32.totalorder %s20, 1
      %p170 = scmp.ne.s32.totalorder %s165, %s167
      %p171 = scmp.eq.s32.totalorder %s20, 0
      %p172 = por %p170, %p171
      %p173 = scmp.ne.s32.totalorder %s165, %s167
      %p174 = scmp.eq.s32.totalorder %s25, 1
      %p175 = por %p173, %p174
      %p176 = scmp.ne.s32.totalorder %s167, %s168
      %p177 = scmp.eq.s32.totalorder %s25, 0
      %p178 = por %p176, %p177
      %p179 = scmp.ne.s32.totalorder %s167, %s168
      %p180 = scmp.eq.s32.totalorder %s26, 1
      %p181 = por %p179, %p180
      %p183 = scmp.ne.s32.totalorder %s168, %s182
      %p184 = scmp.eq.s32.totalorder %s26, 0
      %p185 = por %p183, %p184
      %s187 = sadd.s32 %s186, 1
      %p190 = scmp.eq.s32.totalorder %s20, 1
      %p191 = scmp.ne.s32.totalorder %s186, %s188
      %p192 = scmp.eq.s32.totalorder %s20, 0
      %p193 = por %p191, %p192
      %p194 = scmp.ne.s32.totalorder %s186, %s188
      %p195 = scmp.eq.s32.totalorder %s25, 1
      %p196 = por %p194, %p195
      %p197 = scmp.ne.s32.totalorder %s188, %s189
      %p198 = scmp.eq.s32.totalorder %s25, 0
      %p199 = por %p197, %p198
      %p200 = scmp.ne.s32.totalorder %s188, %s189
      %p201 = scmp.eq.s32.totalorder %s26, 1
      %p202 = por %p200, %p201
      %p204 = scmp.ne.s32.totalorder %s189, %s203
      %p205 = scmp.eq.s32.totalorder %s26, 0
      %p206 = por %p204, %p205
      %s207 = ssub.s32 %s27, %s39
      %p208 = scmp.eq.s32.totalorder %s207, 0
      %s210 = sadd.s32 %s209, 1
      %s211 = scalar_select %p208, %s209, %s210
      %p214 = pneg %p208
      %p215 = scmp.eq.s32.totalorder %s20, 1
      %p216 = por %p214, %p215
      %p217 = scmp.ne.s32.totalorder %s209, %s212
      %p218 = scmp.eq.s32.totalorder %s20, 0
      %p219 = por %p217, %p218
      %p220 = scmp.ne.s32.totalorder %s209, %s212
      %p221 = scmp.eq.s32.totalorder %s25, 1
      %p222 = por %p220, %p221
      %p223 = scmp.ne.s32.totalorder %s212, %s213
      %p224 = scmp.eq.s32.totalorder %s25, 0
      %p225 = por %p223, %p224
      %p226 = scmp.ne.s32.totalorder %s212, %s213
      %p227 = scmp.eq.s32.totalorder %s26, 1
      %p228 = por %p226, %p227
      %p230 = scmp.ne.s32.totalorder %s213, %s229
      %p231 = scmp.eq.s32.totalorder %s26, 0
      %p232 = por %p230, %p231
      %p233 = scmp.le.s32.totalorder 1, %s20
      %p234 = scmp.lt.s32.totalorder %s20, 3
      %p235 = pnand %p233, %p234
      %p236 = pneg %p235
      // Predicated region
      $region9: #{tpu_custom_call.1} parent=5 // pred_check
        _
      $region10: #{tpu_custom_call.1} parent=5 // pred_check_branch
        %238 = sbr.rel (%p235) target = $region12
      $region11: #{tpu_custom_call.1} parent=5 // pred_region
        %s239 = ssub.s32 %s20, 1
        // Predicated region
        $region13: #{tpu_custom_call.1} parent=11 // pred_check
          %p240 = pneg %p84
        $region14: #{tpu_custom_call.1} parent=11 // pred_check_branch
          %242 = sbr.rel (%p240) target = $region16
        $region15: #{tpu_custom_call.1} parent=11 // pred_region
          %s243 = smul.u32 4, %s30
          %s245 = ssub.s32 4096, 4096
          %246 = vsyncadd [#allocation7], %s245
          %s247 = smul.addr %s243, 64
          %s248 = scalar_lea.hbm %s1, %s247
          %s249 = sshll.u32 [#allocation6], 4
          %s250 = int_to_ptr.vmem [resolvable:$true] %s249
          %255 = dma.hbm_to_vmem [thread:$0]  %s248, 4096, %s250, [#allocation7], 256, 256, 16
        $region16: #{tpu_custom_call.1} parent=11 // pred_fallthru
          _
        // Predicated region
        $region17: #{tpu_custom_call.1} parent=11 // pred_check
          %p256 = pneg %p110
        $region18: #{tpu_custom_call.1} parent=11 // pred_check_branch
          %258 = sbr.rel (%p256) target = $region20
        $region19: #{tpu_custom_call.1} parent=11 // pred_region
          %s259 = smul.u32 4, %s30
          %p260 = scmp.lt.s32.totalorder %s259, 3
          %s261 = scalar_select %p260, %s259, 3
          %s262 = scalar_lea.vmem %s2, %s261
          %s263 = smul.u32 4, %s30
        $region20: #{tpu_custom_call.1} parent=11 // pred_fallthru
          _
        // Predicated region
        $region21: #{tpu_custom_call.1} parent=11 // pred_check
          %p264 = pneg %p136
        $region22: #{tpu_custom_call.1} parent=11 // pred_check_branch
          %266 = sbr.rel (%p264) target = $region24
        $region23: #{tpu_custom_call.1} parent=11 // pred_region
          %s267 = smul.u32 64, %s30
          %s269 = ssub.s32 4096, 4096
          %270 = vsyncadd [#allocation7], %s269
          %s271 = smul.addr %s267, 64
          %s272 = scalar_lea.hbm %s3, %s271
          %s273 = sshll.u32 [#allocation8], 4
          %s274 = int_to_ptr.vmem [resolvable:$true] %s273
          %279 = dma.hbm_to_vmem [thread:$0]  %s272, 4096, %s274, [#allocation7], 64, 64, 4
        $region24: #{tpu_custom_call.1} parent=11 // pred_fallthru
          _
        // Predicated region
        $region25: #{tpu_custom_call.1} parent=11 // pred_check
          %p280 = pneg %p157
        $region26: #{tpu_custom_call.1} parent=11 // pred_check_branch
          %282 = sbr.rel (%p280) target = $region28
        $region27: #{tpu_custom_call.1} parent=11 // pred_region
          _
        $region28: #{tpu_custom_call.1} parent=11 // pred_fallthru
          _
        // Predicated region
        $region29: #{tpu_custom_call.1} parent=11 // pred_check
          %p283 = pneg %p178
        $region30: #{tpu_custom_call.1} parent=11 // pred_check_branch
          %285 = sbr.rel (%p283) target = $region32
        $region31: #{tpu_custom_call.1} parent=11 // pred_region
          _
        $region32: #{tpu_custom_call.1} parent=11 // pred_fallthru
          _
        // Predicated region
        $region33: #{tpu_custom_call.1} parent=11 // pred_check
          %p286 = pneg %p199
        $region34: #{tpu_custom_call.1} parent=11 // pred_check_branch
          %288 = sbr.rel (%p286) target = $region36
        $region35: #{tpu_custom_call.1} parent=11 // pred_region
          _
        $region36: #{tpu_custom_call.1} parent=11 // pred_fallthru
          _
      $region12: #{tpu_custom_call.1} parent=5 // pred_fallthru
        _
      %p289 = scmp.lt.s32.totalorder %s20, 2
      // Predicated region
      $region37: #{tpu_custom_call.1} parent=5 // pred_check
        %p290 = pneg %p289
      $region38: #{tpu_custom_call.1} parent=5 // pred_check_branch
        %292 = sbr.rel (%p290) target = $region40
      $region39: #{tpu_custom_call.1} parent=5 // pred_region
        // Predicated region
        $region41: #{tpu_custom_call.1} parent=39 // pred_check
          %p293 = pneg %p52
        $region42: #{tpu_custom_call.1} parent=39 // pred_check_branch
          %295 = sbr.rel (%p293) target = $region44
        $region43: #{tpu_custom_call.1} parent=39 // pred_region
          %s296 = sand.u32 %s42, 1
          %s297 = scalar_lea.sflag [#allocation4], %s296
          %s298 = sand.u32 %s42, 1
          %s299 = smul.addr %s298, 128
          %s300 = scalar_lea.vmem [#allocation3], %s299
          %s301 = smul.u32 32, %s27
          %s303 = ssub.s32 2048, 2048
          %304 = vsyncadd %s297, %s303
          %s305 = smul.addr %s301, 64
          %s306 = scalar_lea.hbm %s0, %s305
          %s307 = sshll.u32 %s300, 4
          %s308 = int_to_ptr.vmem [resolvable:$true] %s307
          %313 = dma.hbm_to_vmem [thread:$0]  %s306, 2048, %s308, %s297, 64, 64, 4
        $region44: #{tpu_custom_call.1} parent=39 // pred_fallthru
          _
      $region40: #{tpu_custom_call.1} parent=5 // pred_fallthru
        _
      %p314 = scmp.le.s32.totalorder 1, %s20
      %p315 = scmp.lt.s32.totalorder %s20, 3
      %p316 = pnand %p314, %p315
      %p317 = pneg %p316
      // Predicated region
      $region45: #{tpu_custom_call.1} parent=5 // pred_check
        _
      $region46: #{tpu_custom_call.1} parent=5 // pred_check_branch
        %319 = sbr.rel (%p316) target = $region48
      $region47: #{tpu_custom_call.1} parent=5 // pred_region
        %s320 = ssub.s32 %s20, 1
        %s321 = sand.u32 %s45, 1
        %s322 = scalar_lea.sflag [#allocation4], %s321
        %s323 = sand.u32 %s45, 1
        %s324 = smul.addr %s323, 128
        %s325 = scalar_lea.vmem [#allocation3], %s324
        // Predicated region
        $region49: #{tpu_custom_call.1} parent=47 // pred_check
          %p326 = pneg %p58
        $region50: #{tpu_custom_call.1} parent=47 // pred_check_branch
          %328 = sbr.rel (%p326) target = $region52
        $region51: #{tpu_custom_call.1} parent=47 // pred_region
          %329 = dma.done %s322, 2048
        $region52: #{tpu_custom_call.1} parent=47 // pred_fallthru
          _
        // Predicated region
        $region53: #{tpu_custom_call.1} parent=47 // pred_check
          %p330 = pneg %p84
        $region54: #{tpu_custom_call.1} parent=47 // pred_check_branch
          %332 = sbr.rel (%p330) target = $region56
        $region55: #{tpu_custom_call.1} parent=47 // pred_region
          %333 = dma.done [#allocation7], 4096
        $region56: #{tpu_custom_call.1} parent=47 // pred_fallthru
          _
        // Predicated region
        $region57: #{tpu_custom_call.1} parent=47 // pred_check
          %p334 = pneg %p136
        $region58: #{tpu_custom_call.1} parent=47 // pred_check_branch
          %336 = sbr.rel (%p334) target = $region60
        $region59: #{tpu_custom_call.1} parent=47 // pred_region
          %337 = dma.done [#allocation7], 4096
        $region60: #{tpu_custom_call.1} parent=47 // pred_fallthru
          _
        %s338 = sand.u32 %s45, 1
        %s339 = scalar_lea.sflag [#allocation4], %s338
        %s340 = sand.u32 %s45, 1
        %s341 = smul.addr %s340, 128
        %s342 = scalar_lea.vmem [#allocation3], %s341
        %p343 = pneg %p58
        %p344 = pneg %p55
        %p345 = pneg %p84
        %p346 = pneg %p81
        %s347 = smul.u32 4, %s30
        %p348 = scmp.lt.s32.totalorder %s347, 3
        %s349 = scalar_select %p348, %s347, 3
        %s350 = scalar_lea.vmem %s2, %s349
        %p351 = pneg %p110
        %p352 = pneg %p107
        %p353 = pneg %p136
        %p354 = pneg %p133
        %p355 = pneg %p157
        %p356 = pneg %p154
        %p357 = pneg %p178
        %p358 = pneg %p175
        %p359 = pneg %p199
        %p360 = pneg %p196
        %p361 = pneg %p225
        %p362 = pneg %p222
        %s363 = sand.u32 %s212, 1
        %s364 = scalar_lea.sflag [#allocation5], %s363
        %s365 = sand.u32 %s212, 1
        %s366 = smul.addr %s365, 256
        %s367 = scalar_lea.vmem [#allocation9], %s366
        %s368 = smul.u32 32, %s29
        %s369 = smul.u32 4, %s30
        %s370 = smul.u32 4, %s30
        %p371 = scmp.lt.s32.totalorder %s370, 3
        %s372 = scalar_select %p371, %s370, 3
        %s373 = scalar_lea.vmem %s2, %s372
        %s374 = smul.u32 4, %s30
        %s375 = smul.u32 64, %s30
        %s376 = smul.u32 32, %s29
        %v378 = vld [vmem:[%s325] sm:$0xf]
        %v379 = vld [vmem:[%s325 + $0x4] sm:$0xf]
        %v380 = vld [vmem:[%s325 + $0x8] sm:$0xf]
        %v381 = vld [vmem:[%s325 + $0xc] sm:$0xf]
        %v382 = vld [vmem:[%s325 + $0x10] sm:$0xf]
        %v383 = vld [vmem:[%s325 + $0x14] sm:$0xf]
        %v384 = vld [vmem:[%s325 + $0x18] sm:$0xf]
        %v385 = vld [vmem:[%s325 + $0x1c] sm:$0xf]
        %v386 = vld [vmem:[%s325 + $0x20] sm:$0xf]
        %v387 = vld [vmem:[%s325 + $0x24] sm:$0xf]
        %v388 = vld [vmem:[%s325 + $0x28] sm:$0xf]
        %v389 = vld [vmem:[%s325 + $0x2c] sm:$0xf]
        %v390 = vld [vmem:[%s325 + $0x30] sm:$0xf]
        %v391 = vld [vmem:[%s325 + $0x34] sm:$0xf]
        %v392 = vld [vmem:[%s325 + $0x38] sm:$0xf]
        %v393 = vld [vmem:[%s325 + $0x3c] sm:$0xf]
        %v394 = vld [vmem:[%s325 + $0x40] sm:$0xf]
        %v395 = vld [vmem:[%s325 + $0x44] sm:$0xf]
        %v396 = vld [vmem:[%s325 + $0x48] sm:$0xf]
        %v397 = vld [vmem:[%s325 + $0x4c] sm:$0xf]
        %v398 = vld [vmem:[%s325 + $0x50] sm:$0xf]
        %v399 = vld [vmem:[%s325 + $0x54] sm:$0xf]
        %v400 = vld [vmem:[%s325 + $0x58] sm:$0xf]
        %v401 = vld [vmem:[%s325 + $0x5c] sm:$0xf]
        %v402 = vld [vmem:[%s325 + $0x60] sm:$0xf]
        %v403 = vld [vmem:[%s325 + $0x64] sm:$0xf]
        %v404 = vld [vmem:[%s325 + $0x68] sm:$0xf]
        %v405 = vld [vmem:[%s325 + $0x6c] sm:$0xf]
        %v406 = vld [vmem:[%s325 + $0x70] sm:$0xf]
        %v407 = vld [vmem:[%s325 + $0x74] sm:$0xf]
        %v408 = vld [vmem:[%s325 + $0x78] sm:$0xf]
        %v409 = vld [vmem:[%s325 + $0x7c] sm:$0xf]
        %p410 = scmp.eq.s32.totalorder %s30, 0
        // Predicated region
        $region61: #{tpu_custom_call.1} parent=47 // pred_check
          %p411 = pneg %p410
        $region62: #{tpu_custom_call.1} parent=47 // pred_check_branch
          %413 = sbr.rel (%p411) target = $region64
        $region63: #{tpu_custom_call.1} parent=47 // pred_region
          %v414 = vunpack.c.l.bf16 %v378
          %v415 = vunpack.c.l.bf16 %v379
          %v416 = vunpack.c.l.bf16 %v380
          %v417 = vunpack.c.l.bf16 %v381
          %v418 = vunpack.c.l.bf16 %v382
          %v419 = vunpack.c.l.bf16 %v383
          %v420 = vunpack.c.l.bf16 %v384
          %v421 = vunpack.c.l.bf16 %v385
          %v422 = vunpack.c.l.bf16 %v386
          %v423 = vunpack.c.l.bf16 %v387
          %v424 = vunpack.c.l.bf16 %v388
          %v425 = vunpack.c.l.bf16 %v389
          %v426 = vunpack.c.l.bf16 %v390
          %v427 = vunpack.c.l.bf16 %v391
          %v428 = vunpack.c.l.bf16 %v392
          %v429 = vunpack.c.l.bf16 %v393
          %v430 = vunpack.c.l.bf16 %v394
          %v431 = vunpack.c.l.bf16 %v395
          %v432 = vunpack.c.l.bf16 %v396
          %v433 = vunpack.c.l.bf16 %v397
          %v434 = vunpack.c.l.bf16 %v398
          %v435 = vunpack.c.l.bf16 %v399
          %v436 = vunpack.c.l.bf16 %v400
          %v437 = vunpack.c.l.bf16 %v401
          %v438 = vunpack.c.l.bf16 %v402
          %v439 = vunpack.c.l.bf16 %v403
          %v440 = vunpack.c.l.bf16 %v404
          %v441 = vunpack.c.l.bf16 %v405
          %v442 = vunpack.c.l.bf16 %v406
          %v443 = vunpack.c.l.bf16 %v407
          %v444 = vunpack.c.l.bf16 %v408
          %v445 = vunpack.c.l.bf16 %v409
          %v446 = vld [vmem:[%s4] sm:$0x1]
          %v448 = vlaneseq
          %v449 = vshrl.u32 %v448, 7
          %v450 = vsub.s32 0, %v449
          %v451 = vrot.slane %v446, %v450
          %v453 = vadd.f32 %v414, %v451
          %v454 = vadd.f32 %v415, %v451
          %v455 = vadd.f32 %v416, %v451
          %v456 = vadd.f32 %v417, %v451
          %v457 = vadd.f32 %v418, %v451
          %v458 = vadd.f32 %v419, %v451
          %v459 = vadd.f32 %v420, %v451
          %v460 = vadd.f32 %v421, %v451
          %v461 = vadd.f32 %v422, %v451
          %v462 = vadd.f32 %v423, %v451
          %v463 = vadd.f32 %v424, %v451
          %v464 = vadd.f32 %v425, %v451
          %v465 = vadd.f32 %v426, %v451
          %v466 = vadd.f32 %v427, %v451
          %v467 = vadd.f32 %v428, %v451
          %v468 = vadd.f32 %v429, %v451
          %v469 = vadd.f32 %v430, %v451
          %v470 = vadd.f32 %v431, %v451
          %v471 = vadd.f32 %v432, %v451
          %v472 = vadd.f32 %v433, %v451
          %v473 = vadd.f32 %v434, %v451
          %v474 = vadd.f32 %v435, %v451
          %v475 = vadd.f32 %v436, %v451
          %v476 = vadd.f32 %v437, %v451
          %v477 = vadd.f32 %v438, %v451
          %v478 = vadd.f32 %v439, %v451
          %v479 = vadd.f32 %v440, %v451
          %v480 = vadd.f32 %v441, %v451
          %v481 = vadd.f32 %v442, %v451
          %v482 = vadd.f32 %v443, %v451
          %v483 = vadd.f32 %v444, %v451
          %v484 = vadd.f32 %v445, %v451
          %485 = vst [vmem:[#allocation2] sm:$0xff] %v453
          %486 = vst [vmem:[#allocation2 + $0x8] sm:$0xff] %v454
          %487 = vst [vmem:[#allocation2 + $0x10] sm:$0xff] %v455
          %488 = vst [vmem:[#allocation2 + $0x18] sm:$0xff] %v456
          %489 = vst [vmem:[#allocation2 + $0x20] sm:$0xff] %v457
          %490 = vst [vmem:[#allocation2 + $0x28] sm:$0xff] %v458
          %491 = vst [vmem:[#allocation2 + $0x30] sm:$0xff] %v459
          %492 = vst [vmem:[#allocation2 + $0x38] sm:$0xff] %v460
          %493 = vst [vmem:[#allocation2 + $0x40] sm:$0xff] %v461
          %494 = vst [vmem:[#allocation2 + $0x48] sm:$0xff] %v462
          %495 = vst [vmem:[#allocation2 + $0x50] sm:$0xff] %v463
          %496 = vst [vmem:[#allocation2 + $0x58] sm:$0xff] %v464
          %497 = vst [vmem:[#allocation2 + $0x60] sm:$0xff] %v465
          %498 = vst [vmem:[#allocation2 + $0x68] sm:$0xff] %v466
          %499 = vst [vmem:[#allocation2 + $0x70] sm:$0xff] %v467
          %500 = vst [vmem:[#allocation2 + $0x78] sm:$0xff] %v468
          %501 = vst [vmem:[#allocation2 + $0x80] sm:$0xff] %v469
          %502 = vst [vmem:[#allocation2 + $0x88] sm:$0xff] %v470
          %503 = vst [vmem:[#allocation2 + $0x90] sm:$0xff] %v471
          %504 = vst [vmem:[#allocation2 + $0x98] sm:$0xff] %v472
          %505 = vst [vmem:[#allocation2 + $0xa0] sm:$0xff] %v473
          %506 = vst [vmem:[#allocation2 + $0xa8] sm:$0xff] %v474
          %507 = vst [vmem:[#allocation2 + $0xb0] sm:$0xff] %v475
          %508 = vst [vmem:[#allocation2 + $0xb8] sm:$0xff] %v476
          %509 = vst [vmem:[#allocation2 + $0xc0] sm:$0xff] %v477
          %510 = vst [vmem:[#allocation2 + $0xc8] sm:$0xff] %v478
          %511 = vst [vmem:[#allocation2 + $0xd0] sm:$0xff] %v479
          %512 = vst [vmem:[#allocation2 + $0xd8] sm:$0xff] %v480
          %513 = vst [vmem:[#allocation2 + $0xe0] sm:$0xff] %v481
          %514 = vst [vmem:[#allocation2 + $0xe8] sm:$0xff] %v482
          %515 = vst [vmem:[#allocation2 + $0xf0] sm:$0xff] %v483
          %516 = vst [vmem:[#allocation2 + $0xf8] sm:$0xff] %v484
        $region64: #{tpu_custom_call.1} parent=47 // pred_fallthru
          _
        %v517 = vld [vmem:[#allocation6] sm:$0xff]
        %v518 = vld [vmem:[#allocation6 + $0x8] sm:$0xff]
        %v519 = vld [vmem:[#allocation6 + $0x10] sm:$0xff]
        %v520 = vld [vmem:[#allocation6 + $0x18] sm:$0xff]
        %v521 = vld [vmem:[#allocation6 + $0x20] sm:$0xff]
        %v522 = vld [vmem:[#allocation6 + $0x28] sm:$0xff]
        %v523 = vld [vmem:[#allocation6 + $0x30] sm:$0xff]
        %v524 = vld [vmem:[#allocation6 + $0x38] sm:$0xff]
        %v525 = vld [vmem:[#allocation6 + $0x40] sm:$0xff]
        %v526 = vld [vmem:[#allocation6 + $0x48] sm:$0xff]
        %v527 = vld [vmem:[#allocation6 + $0x50] sm:$0xff]
        %v528 = vld [vmem:[#allocation6 + $0x58] sm:$0xff]
        %v529 = vld [vmem:[#allocation6 + $0x60] sm:$0xff]
        %v530 = vld [vmem:[#allocation6 + $0x68] sm:$0xff]
        %v531 = vld [vmem:[#allocation6 + $0x70] sm:$0xff]
        %v532 = vld [vmem:[#allocation6 + $0x78] sm:$0xff]
        %v533 = vld [vmem:[#allocation6 + $0x80] sm:$0xff]
        %v534 = vld [vmem:[#allocation6 + $0x88] sm:$0xff]
        %v535 = vld [vmem:[#allocation6 + $0x90] sm:$0xff]
        %v536 = vld [vmem:[#allocation6 + $0x98] sm:$0xff]
        %v537 = vld [vmem:[#allocation6 + $0xa0] sm:$0xff]
        %v538 = vld [vmem:[#allocation6 + $0xa8] sm:$0xff]
        %v539 = vld [vmem:[#allocation6 + $0xb0] sm:$0xff]
        %v540 = vld [vmem:[#allocation6 + $0xb8] sm:$0xff]
        %v541 = vld [vmem:[#allocation6 + $0xc0] sm:$0xff]
        %v542 = vld [vmem:[#allocation6 + $0xc8] sm:$0xff]
        %v543 = vld [vmem:[#allocation6 + $0xd0] sm:$0xff]
        %v544 = vld [vmem:[#allocation6 + $0xd8] sm:$0xff]
        %v545 = vld [vmem:[#allocation6 + $0xe0] sm:$0xff]
        %v546 = vld [vmem:[#allocation6 + $0xe8] sm:$0xff]
        %v547 = vld [vmem:[#allocation6 + $0xf0] sm:$0xff]
        %v548 = vld [vmem:[#allocation6 + $0xf8] sm:$0xff]
        %v549 = vld [vmem:[%s373] sm:$0xf]
        %v551 = vlaneseq
        %v552 = vshrl.u32 %v551, 7
        %v553 = vsub.s32 0, %v552
        %v554 = vrot.slane %v549, %v553
        %v555 = vlaneseq
        %v556 = vshrl.u32 %v555, 7
        %v557 = vsub.s32 1, %v556
        %v558 = vrot.slane %v549, %v557
        %v559 = vlaneseq
        %v560 = vshrl.u32 %v559, 7
        %v561 = vsub.s32 2, %v560
        %v562 = vrot.slane %v549, %v561
        %v563 = vlaneseq
        %v564 = vshrl.u32 %v563, 7
        %v565 = vsub.s32 3, %v564
        %v566 = vrot.slane %v549, %v565
        %v603 = vunpack.c.l.b16 %v378
        %v604 = vunpack.c.l.b16 %v379
        %v605 = vunpack.c.l.b16 %v380
        %v606 = vunpack.c.l.b16 %v381
        %v607 = vunpack.c.l.b16 %v382
        %v608 = vunpack.c.l.b16 %v383
        %v609 = vunpack.c.l.b16 %v384
        %v610 = vunpack.c.l.b16 %v385
        %v611 = vunpack.c.l.b16 %v386
        %v612 = vunpack.c.l.b16 %v387
        %v613 = vunpack.c.l.b16 %v388
        %v614 = vunpack.c.l.b16 %v389
        %v615 = vunpack.c.l.b16 %v390
        %v616 = vunpack.c.l.b16 %v391
        %v617 = vunpack.c.l.b16 %v392
        %v618 = vunpack.c.l.b16 %v393
        %v619 = vunpack.c.l.b16 %v394
        %v620 = vunpack.c.l.b16 %v395
        %v621 = vunpack.c.l.b16 %v396
        %v622 = vunpack.c.l.b16 %v397
        %v623 = vunpack.c.l.b16 %v398
        %v624 = vunpack.c.l.b16 %v399
        %v625 = vunpack.c.l.b16 %v400
        %v626 = vunpack.c.l.b16 %v401
        %v627 = vunpack.c.l.b16 %v402
        %v628 = vunpack.c.l.b16 %v403
        %v629 = vunpack.c.l.b16 %v404
        %v630 = vunpack.c.l.b16 %v405
        %v631 = vunpack.c.l.b16 %v406
        %v632 = vunpack.c.l.b16 %v407
        %v633 = vunpack.c.l.b16 %v408
        %v634 = vunpack.c.l.b16 %v409
        %v635 = vpack.c.b16 %v604, %v603
        %v636 = vpack.c.b16 %v606, %v605
        %v637 = vpack.c.b16 %v608, %v607
        %v638 = vpack.c.b16 %v610, %v609
        %v639 = vpack.c.b16 %v612, %v611
        %v640 = vpack.c.b16 %v614, %v613
        %v641 = vpack.c.b16 %v616, %v615
        %v642 = vpack.c.b16 %v618, %v617
        %v643 = vpack.c.b16 %v620, %v619
        %v644 = vpack.c.b16 %v622, %v621
        %v645 = vpack.c.b16 %v624, %v623
        %v646 = vpack.c.b16 %v626, %v625
        %v647 = vpack.c.b16 %v628, %v627
        %v648 = vpack.c.b16 %v630, %v629
        %v649 = vpack.c.b16 %v632, %v631
        %v650 = vpack.c.b16 %v634, %v633
        %v699 = vunpack.c.l.b16 %v517
        %v700 = vunpack.c.h.b16 %v517
        %v701 = vunpack.c.l.b16 %v518
        %v702 = vunpack.c.h.b16 %v518
        %v703 = vunpack.c.l.b16 %v519
        %v704 = vunpack.c.h.b16 %v519
        %v705 = vunpack.c.l.b16 %v520
        %v706 = vunpack.c.h.b16 %v520
        %v707 = vunpack.c.l.b16 %v521
        %v708 = vunpack.c.h.b16 %v521
        %v709 = vunpack.c.l.b16 %v522
        %v710 = vunpack.c.h.b16 %v522
        %v711 = vunpack.c.l.b16 %v523
        %v712 = vunpack.c.h.b16 %v523
        %v713 = vunpack.c.l.b16 %v524
        %v714 = vunpack.c.h.b16 %v524
        %v715 = vunpack.c.l.b16 %v525
        %v716 = vunpack.c.h.b16 %v525
        %v717 = vunpack.c.l.b16 %v526
        %v718 = vunpack.c.h.b16 %v526
        %v719 = vunpack.c.l.b16 %v527
        %v720 = vunpack.c.h.b16 %v527
        %v721 = vunpack.c.l.b16 %v528
        %v722 = vunpack.c.h.b16 %v528
        %v723 = vunpack.c.l.b16 %v529
        %v724 = vunpack.c.h.b16 %v529
        %v725 = vunpack.c.l.b16 %v530
        %v726 = vunpack.c.h.b16 %v530
        %v727 = vunpack.c.l.b16 %v531
        %v728 = vunpack.c.h.b16 %v531
        %v729 = vunpack.c.l.b16 %v532
        %v730 = vunpack.c.h.b16 %v532
        %v731 = vunpack.c.l.b16 %v533
        %v732 = vunpack.c.h.b16 %v533
        %v733 = vunpack.c.l.b16 %v534
        %v734 = vunpack.c.h.b16 %v534
        %v735 = vunpack.c.l.b16 %v535
        %v736 = vunpack.c.h.b16 %v535
        %v737 = vunpack.c.l.b16 %v536
        %v738 = vunpack.c.h.b16 %v536
        %v739 = vunpack.c.l.b16 %v537
        %v740 = vunpack.c.h.b16 %v537
        %v741 = vunpack.c.l.b16 %v538
        %v742 = vunpack.c.h.b16 %v538
        %v743 = vunpack.c.l.b16 %v539
        %v744 = vunpack.c.h.b16 %v539
        %v745 = vunpack.c.l.b16 %v540
        %v746 = vunpack.c.h.b16 %v540
        %v747 = vunpack.c.l.b16 %v541
        %v748 = vunpack.c.h.b16 %v541
        %v749 = vunpack.c.l.b16 %v542
        %v750 = vunpack.c.h.b16 %v542
        %v751 = vunpack.c.l.b16 %v543
        %v752 = vunpack.c.h.b16 %v543
        %v753 = vunpack.c.l.b16 %v544
        %v754 = vunpack.c.h.b16 %v544
        %v755 = vunpack.c.l.b16 %v545
        %v756 = vunpack.c.h.b16 %v545
        %v757 = vunpack.c.l.b16 %v546
        %v758 = vunpack.c.h.b16 %v546
        %v759 = vunpack.c.l.b16 %v547
        %v760 = vunpack.c.h.b16 %v547
        %v761 = vunpack.c.l.b16 %v548
        %v762 = vunpack.c.h.b16 %v548
        %v763 = vpack.c.b16 %v703, %v699
        %v764 = vpack.c.b16 %v704, %v700
        %v765 = vpack.c.b16 %v705, %v701
        %v766 = vpack.c.b16 %v706, %v702
        %v767 = vpack.c.b16 %v711, %v707
        %v768 = vpack.c.b16 %v712, %v708
        %v769 = vpack.c.b16 %v713, %v709
        %v770 = vpack.c.b16 %v714, %v710
        %v771 = vpack.c.b16 %v719, %v715
        %v772 = vpack.c.b16 %v720, %v716
        %v773 = vpack.c.b16 %v721, %v717
        %v774 = vpack.c.b16 %v722, %v718
        %v775 = vpack.c.b16 %v727, %v723
        %v776 = vpack.c.b16 %v728, %v724
        %v777 = vpack.c.b16 %v729, %v725
        %v778 = vpack.c.b16 %v730, %v726
        %v779 = vpack.c.b16 %v735, %v731
        %v780 = vpack.c.b16 %v736, %v732
        %v781 = vpack.c.b16 %v737, %v733
        %v782 = vpack.c.b16 %v738, %v734
        %v783 = vpack.c.b16 %v743, %v739
        %v784 = vpack.c.b16 %v744, %v740
        %v785 = vpack.c.b16 %v745, %v741
        %v786 = vpack.c.b16 %v746, %v742
        %v787 = vpack.c.b16 %v751, %v747
        %v788 = vpack.c.b16 %v752, %v748
        %v789 = vpack.c.b16 %v753, %v749
        %v790 = vpack.c.b16 %v754, %v750
        %v791 = vpack.c.b16 %v759, %v755
        %v792 = vpack.c.b16 %v760, %v756
        %v793 = vpack.c.b16 %v761, %v757
        %v794 = vpack.c.b16 %v762, %v758
        %827 = vmatprep.subr.bf16.mxu0 %v764
        %828 = vmatpush1.bf16.msra.mxu0 %v763
        %829 = vmatprep.subr.bf16.mxu0 %v768
        %830 = vmatpush1.bf16.msra.mxu0 %v767
        %831 = vmatprep.subr.bf16.mxu0 %v772
        %832 = vmatpush1.bf16.msra.mxu0 %v771
        %833 = vmatprep.subr.bf16.mxu0 %v776
        %834 = vmatpush1.bf16.msra.mxu0 %v775
        %835 = vmatprep.subr.bf16.mxu0 %v780
        %836 = vmatpush1.bf16.msra.mxu0 %v779
        %837 = vmatprep.subr.bf16.mxu0 %v784
        %838 = vmatpush1.bf16.msra.mxu0 %v783
        %839 = vmatprep.subr.bf16.mxu0 %v788
        %840 = vmatpush1.bf16.msra.mxu0 %v787
        %841 = vmatprep.subr.bf16.mxu0 %v792
        %842 = vmatpush1.bf16.msra.mxu0 %v791
        %843 = vmatprep.subr.bf16.mxu0 0
        %844 = vmatpush1.bf16.msra.mxu0 0
        %845 = vmatprep.subr.bf16.mxu0 0
        %846 = vmatpush1.bf16.msra.mxu0 0
        %847 = vmatprep.subr.bf16.mxu0 0
        %848 = vmatpush1.bf16.msra.mxu0 0
        %849 = vmatprep.subr.bf16.mxu0 0
        %850 = vmatpush1.bf16.msra.mxu0 0
        %851 = vmatprep.subr.bf16.mxu0 0
        %852 = vmatpush1.bf16.msra.mxu0 0
        %853 = vmatprep.subr.bf16.mxu0 0
        %854 = vmatpush1.bf16.msra.mxu0 0
        %855 = vmatprep.subr.bf16.mxu0 0
        %856 = vmatpush1.bf16.msra.mxu0 0
        %857 = vmatprep.subr.bf16.mxu0 0
        %858 = vmatpush1.bf16.msra.mxu0 0
        %859 = vmatprep.mubr.bf16.mxu0 0
        %860 = vmatmul.mubr.bf16.gmra.mrb[0].mxu0 %v635
        %v861 = vpop.f32.mrb[0].mxu0
        %v862 = vadd.f32 %v554, %v861
        %v863 = vpop.f32.mrb[0].mxu0
        %v864 = vadd.f32 %v558, %v863
        %v865 = vpop.f32.mrb[0].mxu0
        %v866 = vadd.f32 %v554, %v865
        %v867 = vpop.f32.mrb[0].mxu0
        %v868 = vadd.f32 %v558, %v867
        %869 = vmatprep.mubr.bf16.mxu0 0
        %870 = vmatmul.mubr.bf16.gmra.mrb[0].mxu0 %v636
        %v871 = vpop.f32.mrb[0].mxu0
        %v872 = vadd.f32 %v554, %v871
        %v873 = vpop.f32.mrb[0].mxu0
        %v874 = vadd.f32 %v558, %v873
        %v875 = vpop.f32.mrb[0].mxu0
        %v876 = vadd.f32 %v554, %v875
        %v877 = vpop.f32.mrb[0].mxu0
        %v878 = vadd.f32 %v558, %v877
        %879 = vmatprep.mubr.bf16.mxu0 0
        %880 = vmatmul.mubr.bf16.gmra.mrb[0].mxu0 %v637
        %v881 = vpop.f32.mrb[0].mxu0
        %v882 = vadd.f32 %v554, %v881
        %v883 = vpop.f32.mrb[0].mxu0
        %v884 = vadd.f32 %v558, %v883
        %v885 = vpop.f32.mrb[0].mxu0
        %v886 = vadd.f32 %v554, %v885
        %v887 = vpop.f32.mrb[0].mxu0
        %v888 = vadd.f32 %v558, %v887
        %889 = vmatprep.mubr.bf16.mxu0 0
        %890 = vmatmul.mubr.bf16.gmra.mrb[0].mxu0 %v638
        %v891 = vpop.f32.mrb[0].mxu0
        %v892 = vadd.f32 %v554, %v891
        %v893 = vpop.f32.mrb[0].mxu0
        %v894 = vadd.f32 %v558, %v893
        %v895 = vpop.f32.mrb[0].mxu0
        %v896 = vadd.f32 %v554, %v895
        %v897 = vpop.f32.mrb[0].mxu0
        %v898 = vadd.f32 %v558, %v897
        %899 = vmatprep.mubr.bf16.mxu0 0
        %900 = vmatmul.mubr.bf16.gmra.mrb[0].mxu0 %v639
        %v901 = vpop.f32.mrb[0].mxu0
        %v902 = vadd.f32 %v554, %v901
        %v903 = vpop.f32.mrb[0].mxu0
        %v904 = vadd.f32 %v558, %v903
        %v905 = vpop.f32.mrb[0].mxu0
        %v906 = vadd.f32 %v554, %v905
        %v907 = vpop.f32.mrb[0].mxu0
        %v908 = vadd.f32 %v558, %v907
        %909 = vmatprep.mubr.bf16.mxu0 0
        %910 = vmatmul.mubr.bf16.gmra.mrb[0].mxu0 %v640
        %v911 = vpop.f32.mrb[0].mxu0
        %v912 = vadd.f32 %v554, %v911
        %v913 = vpop.f32.mrb[0].mxu0
        %v914 = vadd.f32 %v558, %v913
        %v915 = vpop.f32.mrb[0].mxu0
        %v916 = vadd.f32 %v554, %v915
        %v917 = vpop.f32.mrb[0].mxu0
        %v918 = vadd.f32 %v558, %v917
        %919 = vmatprep.mubr.bf16.mxu0 0
        %920 = vmatmul.mubr.bf16.gmra.mrb[0].mxu0 %v641
        %v921 = vpop.f32.mrb[0].mxu0
        %v922 = vadd.f32 %v554, %v921
        %v923 = vpop.f32.mrb[0].mxu0
        %v924 = vadd.f32 %v558, %v923
        %v925 = vpop.f32.mrb[0].mxu0
        %v926 = vadd.f32 %v554, %v925
        %v927 = vpop.f32.mrb[0].mxu0
        %v928 = vadd.f32 %v558, %v927
        %929 = vmatprep.mubr.bf16.mxu0 0
        %930 = vmatmul.mubr.bf16.gmra.mrb[0].mxu0 %v642
        %v931 = vpop.f32.mrb[0].mxu0
        %v932 = vadd.f32 %v554, %v931
        %v933 = vpop.f32.mrb[0].mxu0
        %v934 = vadd.f32 %v558, %v933
        %v935 = vpop.f32.mrb[0].mxu0
        %v936 = vadd.f32 %v554, %v935
        %v937 = vpop.f32.mrb[0].mxu0
        %v938 = vadd.f32 %v558, %v937
        %939 = vmatprep.mubr.bf16.mxu0 0
        %940 = vmatmul.mubr.bf16.gmra.mrb[0].mxu0 %v643
        %v941 = vpop.f32.mrb[0].mxu0
        %v942 = vadd.f32 %v554, %v941
        %v943 = vpop.f32.mrb[0].mxu0
        %v944 = vadd.f32 %v558, %v943
        %v945 = vpop.f32.mrb[0].mxu0
        %v946 = vadd.f32 %v554, %v945
        %v947 = vpop.f32.mrb[0].mxu0
        %v948 = vadd.f32 %v558, %v947
        %949 = vmatprep.mubr.bf16.mxu0 0
        %950 = vmatmul.mubr.bf16.gmra.mrb[0].mxu0 %v644
        %v951 = vpop.f32.mrb[0].mxu0
        %v952 = vadd.f32 %v554, %v951
        %v953 = vpop.f32.mrb[0].mxu0
        %v954 = vadd.f32 %v558, %v953
        %v955 = vpop.f32.mrb[0].mxu0
        %v956 = vadd.f32 %v554, %v955
        %v957 = vpop.f32.mrb[0].mxu0
        %v958 = vadd.f32 %v558, %v957
        %959 = vmatprep.mubr.bf16.mxu0 0
        %960 = vmatmul.mubr.bf16.gmra.mrb[0].mxu0 %v645
        %v961 = vpop.f32.mrb[0].mxu0
        %v962 = vadd.f32 %v554, %v961
        %v963 = vpop.f32.mrb[0].mxu0
        %v964 = vadd.f32 %v558, %v963
        %v965 = vpop.f32.mrb[0].mxu0
        %v966 = vadd.f32 %v554, %v965
        %v967 = vpop.f32.mrb[0].mxu0
        %v968 = vadd.f32 %v558, %v967
        %969 = vmatprep.mubr.bf16.mxu0 0
        %970 = vmatmul.mubr.bf16.gmra.mrb[0].mxu0 %v646
        %v971 = vpop.f32.mrb[0].mxu0
        %v972 = vadd.f32 %v554, %v971
        %v973 = vpop.f32.mrb[0].mxu0
        %v974 = vadd.f32 %v558, %v973
        %v975 = vpop.f32.mrb[0].mxu0
        %v976 = vadd.f32 %v554, %v975
        %v977 = vpop.f32.mrb[0].mxu0
        %v978 = vadd.f32 %v558, %v977
        %979 = vmatprep.mubr.bf16.mxu0 0
        %980 = vmatmul.mubr.bf16.gmra.mrb[0].mxu0 %v647
        %v981 = vpop.f32.mrb[0].mxu0
        %v982 = vadd.f32 %v554, %v981
        %v983 = vpop.f32.mrb[0].mxu0
        %v984 = vadd.f32 %v558, %v983
        %v985 = vpop.f32.mrb[0].mxu0
        %v986 = vadd.f32 %v554, %v985
        %v987 = vpop.f32.mrb[0].mxu0
        %v988 = vadd.f32 %v558, %v987
        %989 = vmatprep.mubr.bf16.mxu0 0
        %990 = vmatmul.mubr.bf16.gmra.mrb[0].mxu0 %v648
        %v991 = vpop.f32.mrb[0].mxu0
        %v992 = vadd.f32 %v554, %v991
        %v993 = vpop.f32.mrb[0].mxu0
        %v994 = vadd.f32 %v558, %v993
        %v995 = vpop.f32.mrb[0].mxu0
        %v996 = vadd.f32 %v554, %v995
        %v997 = vpop.f32.mrb[0].mxu0
        %v998 = vadd.f32 %v558, %v997
        %999 = vmatprep.mubr.bf16.mxu0 0
        %1000 = vmatmul.mubr.bf16.gmra.mrb[0].mxu0 %v649
        %v1001 = vpop.f32.mrb[0].mxu0
        %v1002 = vadd.f32 %v554, %v1001
        %v1003 = vpop.f32.mrb[0].mxu0
        %v1004 = vadd.f32 %v558, %v1003
        %v1005 = vpop.f32.mrb[0].mxu0
        %v1006 = vadd.f32 %v554, %v1005
        %v1007 = vpop.f32.mrb[0].mxu0
        %v1008 = vadd.f32 %v558, %v1007
        %1009 = vmatprep.mubr.bf16.mxu0 0
        %1010 = vmatmul.mubr.bf16.gmra.mrb[0].mxu0 %v650
        %v1011 = vpop.f32.mrb[0].mxu0
        %v1012 = vadd.f32 %v554, %v1011
        %v1013 = vpop.f32.mrb[0].mxu0
        %v1014 = vadd.f32 %v558, %v1013
        %v1015 = vpop.f32.mrb[0].mxu0
        %v1016 = vadd.f32 %v554, %v1015
        %v1017 = vpop.f32.mrb[0].mxu0
        %v1018 = vadd.f32 %v558, %v1017
        %1019 = vdwg.mxu0
        %1020 = vmatprep.subr.bf16.mxu0 %v766
        %1021 = vmatpush1.bf16.msra.mxu0 %v765
        %1022 = vmatprep.subr.bf16.mxu0 %v770
        %1023 = vmatpush1.bf16.msra.mxu0 %v769
        %1024 = vmatprep.subr.bf16.mxu0 %v774
        %1025 = vmatpush1.bf16.msra.mxu0 %v773
        %1026 = vmatprep.subr.bf16.mxu0 %v778
        %1027 = vmatpush1.bf16.msra.mxu0 %v777
        %1028 = vmatprep.subr.bf16.mxu0 %v782
        %1029 = vmatpush1.bf16.msra.mxu0 %v781
        %1030 = vmatprep.subr.bf16.mxu0 %v786
        %1031 = vmatpush1.bf16.msra.mxu0 %v785
        %1032 = vmatprep.subr.bf16.mxu0 %v790
        %1033 = vmatpush1.bf16.msra.mxu0 %v789
        %1034 = vmatprep.subr.bf16.mxu0 %v794
        %1035 = vmatpush1.bf16.msra.mxu0 %v793
        %1036 = vmatprep.subr.bf16.mxu0 0
        %1037 = vmatpush1.bf16.msra.mxu0 0
        %1038 = vmatprep.subr.bf16.mxu0 0
        %1039 = vmatpush1.bf16.msra.mxu0 0
        %1040 = vmatprep.subr.bf16.mxu0 0
        %1041 = vmatpush1.bf16.msra.mxu0 0
        %1042 = vmatprep.subr.bf16.mxu0 0
        %1043 = vmatpush1.bf16.msra.mxu0 0
        %1044 = vmatprep.subr.bf16.mxu0 0
        %1045 = vmatpush1.bf16.msra.mxu0 0
        %1046 = vmatprep.subr.bf16.mxu0 0
        %1047 = vmatpush1.bf16.msra.mxu0 0
        %1048 = vmatprep.subr.bf16.mxu0 0
        %1049 = vmatpush1.bf16.msra.mxu0 0
        %1050 = vmatprep.subr.bf16.mxu0 0
        %1051 = vmatpush1.bf16.msra.mxu0 0
        %1052 = vmatprep.mubr.bf16.mxu0 0
        %1053 = vmatmul.mubr.bf16.gmra.mrb[0].mxu0 %v635
        %v1054 = vpop.f32.mrb[0].mxu0
        %v1055 = vadd.f32 %v562, %v1054
        %v1056 = vpop.f32.mrb[0].mxu0
        %v1057 = vadd.f32 %v566, %v1056
        %v1058 = vpop.f32.mrb[0].mxu0
        %v1059 = vadd.f32 %v562, %v1058
        %v1060 = vpop.f32.mrb[0].mxu0
        %v1061 = vadd.f32 %v566, %v1060
        %1062 = vmatprep.mubr.bf16.mxu0 0
        %1063 = vmatmul.mubr.bf16.gmra.mrb[0].mxu0 %v636
        %v1064 = vpop.f32.mrb[0].mxu0
        %v1065 = vadd.f32 %v562, %v1064
        %v1066 = vpop.f32.mrb[0].mxu0
        %v1067 = vadd.f32 %v566, %v1066
        %v1068 = vpop.f32.mrb[0].mxu0
        %v1069 = vadd.f32 %v562, %v1068
        %v1070 = vpop.f32.mrb[0].mxu0
        %v1071 = vadd.f32 %v566, %v1070
        %1072 = vmatprep.mubr.bf16.mxu0 0
        %1073 = vmatmul.mubr.bf16.gmra.mrb[0].mxu0 %v637
        %v1074 = vpop.f32.mrb[0].mxu0
        %v1075 = vadd.f32 %v562, %v1074
        %v1076 = vpop.f32.mrb[0].mxu0
        %v1077 = vadd.f32 %v566, %v1076
        %v1078 = vpop.f32.mrb[0].mxu0
        %v1079 = vadd.f32 %v562, %v1078
        %v1080 = vpop.f32.mrb[0].mxu0
        %v1081 = vadd.f32 %v566, %v1080
        %1082 = vmatprep.mubr.bf16.mxu0 0
        %1083 = vmatmul.mubr.bf16.gmra.mrb[0].mxu0 %v638
        %v1084 = vpop.f32.mrb[0].mxu0
        %v1085 = vadd.f32 %v562, %v1084
        %v1086 = vpop.f32.mrb[0].mxu0
        %v1087 = vadd.f32 %v566, %v1086
        %v1088 = vpop.f32.mrb[0].mxu0
        %v1089 = vadd.f32 %v562, %v1088
        %v1090 = vpop.f32.mrb[0].mxu0
        %v1091 = vadd.f32 %v566, %v1090
        %1092 = vmatprep.mubr.bf16.mxu0 0
        %1093 = vmatmul.mubr.bf16.gmra.mrb[0].mxu0 %v639
        %v1094 = vpop.f32.mrb[0].mxu0
        %v1095 = vadd.f32 %v562, %v1094
        %v1096 = vpop.f32.mrb[0].mxu0
        %v1097 = vadd.f32 %v566, %v1096
        %v1098 = vpop.f32.mrb[0].mxu0
        %v1099 = vadd.f32 %v562, %v1098
        %v1100 = vpop.f32.mrb[0].mxu0
        %v1101 = vadd.f32 %v566, %v1100
        %1102 = vmatprep.mubr.bf16.mxu0 0
        %1103 = vmatmul.mubr.bf16.gmra.mrb[0].mxu0 %v640
        %v1104 = vpop.f32.mrb[0].mxu0
        %v1105 = vadd.f32 %v562, %v1104
        %v1106 = vpop.f32.mrb[0].mxu0
        %v1107 = vadd.f32 %v566, %v1106
        %v1108 = vpop.f32.mrb[0].mxu0
        %v1109 = vadd.f32 %v562, %v1108
        %v1110 = vpop.f32.mrb[0].mxu0
        %v1111 = vadd.f32 %v566, %v1110
        %1112 = vmatprep.mubr.bf16.mxu0 0
        %1113 = vmatmul.mubr.bf16.gmra.mrb[0].mxu0 %v641
        %v1114 = vpop.f32.mrb[0].mxu0
        %v1115 = vadd.f32 %v562, %v1114
        %v1116 = vpop.f32.mrb[0].mxu0
        %v1117 = vadd.f32 %v566, %v1116
        %v1118 = vpop.f32.mrb[0].mxu0
        %v1119 = vadd.f32 %v562, %v1118
        %v1120 = vpop.f32.mrb[0].mxu0
        %v1121 = vadd.f32 %v566, %v1120
        %1122 = vmatprep.mubr.bf16.mxu0 0
        %1123 = vmatmul.mubr.bf16.gmra.mrb[0].mxu0 %v642
        %v1124 = vpop.f32.mrb[0].mxu0
        %v1125 = vadd.f32 %v562, %v1124
        %v1126 = vpop.f32.mrb[0].mxu0
        %v1127 = vadd.f32 %v566, %v1126
        %v1128 = vpop.f32.mrb[0].mxu0
        %v1129 = vadd.f32 %v562, %v1128
        %v1130 = vpop.f32.mrb[0].mxu0
        %v1131 = vadd.f32 %v566, %v1130
        %1132 = vmatprep.mubr.bf16.mxu0 0
        %1133 = vmatmul.mubr.bf16.gmra.mrb[0].mxu0 %v643
        %v1134 = vpop.f32.mrb[0].mxu0
        %v1135 = vadd.f32 %v562, %v1134
        %v1136 = vpop.f32.mrb[0].mxu0
        %v1137 = vadd.f32 %v566, %v1136
        %v1138 = vpop.f32.mrb[0].mxu0
        %v1139 = vadd.f32 %v562, %v1138
        %v1140 = vpop.f32.mrb[0].mxu0
        %v1141 = vadd.f32 %v566, %v1140
        %1142 = vmatprep.mubr.bf16.mxu0 0
        %1143 = vmatmul.mubr.bf16.gmra.mrb[0].mxu0 %v644
        %v1144 = vpop.f32.mrb[0].mxu0
        %v1145 = vadd.f32 %v562, %v1144
        %v1146 = vpop.f32.mrb[0].mxu0
        %v1147 = vadd.f32 %v566, %v1146
        %v1148 = vpop.f32.mrb[0].mxu0
        %v1149 = vadd.f32 %v562, %v1148
        %v1150 = vpop.f32.mrb[0].mxu0
        %v1151 = vadd.f32 %v566, %v1150
        %1152 = vmatprep.mubr.bf16.mxu0 0
        %1153 = vmatmul.mubr.bf16.gmra.mrb[0].mxu0 %v645
        %v1154 = vpop.f32.mrb[0].mxu0
        %v1155 = vadd.f32 %v562, %v1154
        %v1156 = vpop.f32.mrb[0].mxu0
        %v1157 = vadd.f32 %v566, %v1156
        %v1158 = vpop.f32.mrb[0].mxu0
        %v1159 = vadd.f32 %v562, %v1158
        %v1160 = vpop.f32.mrb[0].mxu0
        %v1161 = vadd.f32 %v566, %v1160
        %1162 = vmatprep.mubr.bf16.mxu0 0
        %1163 = vmatmul.mubr.bf16.gmra.mrb[0].mxu0 %v646
        %v1164 = vpop.f32.mrb[0].mxu0
        %v1165 = vadd.f32 %v562, %v1164
        %v1166 = vpop.f32.mrb[0].mxu0
        %v1167 = vadd.f32 %v566, %v1166
        %v1168 = vpop.f32.mrb[0].mxu0
        %v1169 = vadd.f32 %v562, %v1168
        %v1170 = vpop.f32.mrb[0].mxu0
        %v1171 = vadd.f32 %v566, %v1170
        %1172 = vmatprep.mubr.bf16.mxu0 0
        %1173 = vmatmul.mubr.bf16.gmra.mrb[0].mxu0 %v647
        %v1174 = vpop.f32.mrb[0].mxu0
        %v1175 = vadd.f32 %v562, %v1174
        %v1176 = vpop.f32.mrb[0].mxu0
        %v1177 = vadd.f32 %v566, %v1176
        %v1178 = vpop.f32.mrb[0].mxu0
        %v1179 = vadd.f32 %v562, %v1178
        %v1180 = vpop.f32.mrb[0].mxu0
        %v1181 = vadd.f32 %v566, %v1180
        %1182 = vmatprep.mubr.bf16.mxu0 0
        %1183 = vmatmul.mubr.bf16.gmra.mrb[0].mxu0 %v648
        %v1184 = vpop.f32.mrb[0].mxu0
        %v1185 = vadd.f32 %v562, %v1184
        %v1186 = vpop.f32.mrb[0].mxu0
        %v1187 = vadd.f32 %v566, %v1186
        %v1188 = vpop.f32.mrb[0].mxu0
        %v1189 = vadd.f32 %v562, %v1188
        %v1190 = vpop.f32.mrb[0].mxu0
        %v1191 = vadd.f32 %v566, %v1190
        %1192 = vmatprep.mubr.bf16.mxu0 0
        %1193 = vmatmul.mubr.bf16.gmra.mrb[0].mxu0 %v649
        %v1194 = vpop.f32.mrb[0].mxu0
        %v1195 = vadd.f32 %v562, %v1194
        %v1196 = vpop.f32.mrb[0].mxu0
        %v1197 = vadd.f32 %v566, %v1196
        %v1198 = vpop.f32.mrb[0].mxu0
        %v1199 = vadd.f32 %v562, %v1198
        %v1200 = vpop.f32.mrb[0].mxu0
        %v1201 = vadd.f32 %v566, %v1200
        %1202 = vmatprep.mubr.bf16.mxu0 0
        %1203 = vmatmul.mubr.bf16.gmra.mrb[0].mxu0 %v650
        %v1204 = vpop.f32.mrb[0].mxu0
        %v1205 = vadd.f32 %v562, %v1204
        %v1206 = vpop.f32.mrb[0].mxu0
        %v1207 = vadd.f32 %v566, %v1206
        %v1208 = vpop.f32.mrb[0].mxu0
        %v1209 = vadd.f32 %v562, %v1208
        %v1210 = vpop.f32.mrb[0].mxu0
        %v1211 = vadd.f32 %v566, %v1210
        %1212 = vdwg.mxu0
        %v1213 = vmax.f32 %v862, 0.0
        %v1214 = vmax.f32 %v864, 0.0
        %v1215 = vmax.f32 %v1055, 0.0
        %v1216 = vmax.f32 %v1057, 0.0
        %v1217 = vmax.f32 %v866, 0.0
        %v1218 = vmax.f32 %v868, 0.0
        %v1219 = vmax.f32 %v1059, 0.0
        %v1220 = vmax.f32 %v1061, 0.0
        %v1221 = vmax.f32 %v872, 0.0
        %v1222 = vmax.f32 %v874, 0.0
        %v1223 = vmax.f32 %v1065, 0.0
        %v1224 = vmax.f32 %v1067, 0.0
        %v1225 = vmax.f32 %v876, 0.0
        %v1226 = vmax.f32 %v878, 0.0
        %v1227 = vmax.f32 %v1069, 0.0
        %v1228 = vmax.f32 %v1071, 0.0
        %v1229 = vmax.f32 %v882, 0.0
        %v1230 = vmax.f32 %v884, 0.0
        %v1231 = vmax.f32 %v1075, 0.0
        %v1232 = vmax.f32 %v1077, 0.0
        %v1233 = vmax.f32 %v886, 0.0
        %v1234 = vmax.f32 %v888, 0.0
        %v1235 = vmax.f32 %v1079, 0.0
        %v1236 = vmax.f32 %v1081, 0.0
        %v1237 = vmax.f32 %v892, 0.0
        %v1238 = vmax.f32 %v894, 0.0
        %v1239 = vmax.f32 %v1085, 0.0
        %v1240 = vmax.f32 %v1087, 0.0
        %v1241 = vmax.f32 %v896, 0.0
        %v1242 = vmax.f32 %v898, 0.0
        %v1243 = vmax.f32 %v1089, 0.0
        %v1244 = vmax.f32 %v1091, 0.0
        %v1245 = vmax.f32 %v902, 0.0
        %v1246 = vmax.f32 %v904, 0.0
        %v1247 = vmax.f32 %v1095, 0.0
        %v1248 = vmax.f32 %v1097, 0.0
        %v1249 = vmax.f32 %v906, 0.0
        %v1250 = vmax.f32 %v908, 0.0
        %v1251 = vmax.f32 %v1099, 0.0
        %v1252 = vmax.f32 %v1101, 0.0
        %v1253 = vmax.f32 %v912, 0.0
        %v1254 = vmax.f32 %v914, 0.0
        %v1255 = vmax.f32 %v1105, 0.0
        %v1256 = vmax.f32 %v1107, 0.0
        %v1257 = vmax.f32 %v916, 0.0
        %v1258 = vmax.f32 %v918, 0.0
        %v1259 = vmax.f32 %v1109, 0.0
        %v1260 = vmax.f32 %v1111, 0.0
        %v1261 = vmax.f32 %v922, 0.0
        %v1262 = vmax.f32 %v924, 0.0
        %v1263 = vmax.f32 %v1115, 0.0
        %v1264 = vmax.f32 %v1117, 0.0
        %v1265 = vmax.f32 %v926, 0.0
        %v1266 = vmax.f32 %v928, 0.0
        %v1267 = vmax.f32 %v1119, 0.0
        %v1268 = vmax.f32 %v1121, 0.0
        %v1269 = vmax.f32 %v932, 0.0
        %v1270 = vmax.f32 %v934, 0.0
        %v1271 = vmax.f32 %v1125, 0.0
        %v1272 = vmax.f32 %v1127, 0.0
        %v1273 = vmax.f32 %v936, 0.0
        %v1274 = vmax.f32 %v938, 0.0
        %v1275 = vmax.f32 %v1129, 0.0
        %v1276 = vmax.f32 %v1131, 0.0
        %v1277 = vmax.f32 %v942, 0.0
        %v1278 = vmax.f32 %v944, 0.0
        %v1279 = vmax.f32 %v1135, 0.0
        %v1280 = vmax.f32 %v1137, 0.0
        %v1281 = vmax.f32 %v946, 0.0
        %v1282 = vmax.f32 %v948, 0.0
        %v1283 = vmax.f32 %v1139, 0.0
        %v1284 = vmax.f32 %v1141, 0.0
        %v1285 = vmax.f32 %v952, 0.0
        %v1286 = vmax.f32 %v954, 0.0
        %v1287 = vmax.f32 %v1145, 0.0
        %v1288 = vmax.f32 %v1147, 0.0
        %v1289 = vmax.f32 %v956, 0.0
        %v1290 = vmax.f32 %v958, 0.0
        %v1291 = vmax.f32 %v1149, 0.0
        %v1292 = vmax.f32 %v1151, 0.0
        %v1293 = vmax.f32 %v962, 0.0
        %v1294 = vmax.f32 %v964, 0.0
        %v1295 = vmax.f32 %v1155, 0.0
        %v1296 = vmax.f32 %v1157, 0.0
        %v1297 = vmax.f32 %v966, 0.0
        %v1298 = vmax.f32 %v968, 0.0
        %v1299 = vmax.f32 %v1159, 0.0
        %v1300 = vmax.f32 %v1161, 0.0
        %v1301 = vmax.f32 %v972, 0.0
        %v1302 = vmax.f32 %v974, 0.0
        %v1303 = vmax.f32 %v1165, 0.0
        %v1304 = vmax.f32 %v1167, 0.0
        %v1305 = vmax.f32 %v976, 0.0
        %v1306 = vmax.f32 %v978, 0.0
        %v1307 = vmax.f32 %v1169, 0.0
        %v1308 = vmax.f32 %v1171, 0.0
        %v1309 = vmax.f32 %v982, 0.0
        %v1310 = vmax.f32 %v984, 0.0
        %v1311 = vmax.f32 %v1175, 0.0
        %v1312 = vmax.f32 %v1177, 0.0
        %v1313 = vmax.f32 %v986, 0.0
        %v1314 = vmax.f32 %v988, 0.0
        %v1315 = vmax.f32 %v1179, 0.0
        %v1316 = vmax.f32 %v1181, 0.0
        %v1317 = vmax.f32 %v992, 0.0
        %v1318 = vmax.f32 %v994, 0.0
        %v1319 = vmax.f32 %v1185, 0.0
        %v1320 = vmax.f32 %v1187, 0.0
        %v1321 = vmax.f32 %v996, 0.0
        %v1322 = vmax.f32 %v998, 0.0
        %v1323 = vmax.f32 %v1189, 0.0
        %v1324 = vmax.f32 %v1191, 0.0
        %v1325 = vmax.f32 %v1002, 0.0
        %v1326 = vmax.f32 %v1004, 0.0
        %v1327 = vmax.f32 %v1195, 0.0
        %v1328 = vmax.f32 %v1197, 0.0
        %v1329 = vmax.f32 %v1006, 0.0
        %v1330 = vmax.f32 %v1008, 0.0
        %v1331 = vmax.f32 %v1199, 0.0
        %v1332 = vmax.f32 %v1201, 0.0
        %v1333 = vmax.f32 %v1012, 0.0
        %v1334 = vmax.f32 %v1014, 0.0
        %v1335 = vmax.f32 %v1205, 0.0
        %v1336 = vmax.f32 %v1207, 0.0
        %v1337 = vmax.f32 %v1016, 0.0
        %v1338 = vmax.f32 %v1018, 0.0
        %v1339 = vmax.f32 %v1209, 0.0
        %v1340 = vmax.f32 %v1211, 0.0
        %v1341 = vld [vmem:[#allocation2] sm:$0xff]
        %v1342 = vld [vmem:[#allocation2 + $0x8] sm:$0xff]
        %v1343 = vld [vmem:[#allocation2 + $0x10] sm:$0xff]
        %v1344 = vld [vmem:[#allocation2 + $0x18] sm:$0xff]
        %v1345 = vld [vmem:[#allocation2 + $0x20] sm:$0xff]
        %v1346 = vld [vmem:[#allocation2 + $0x28] sm:$0xff]
        %v1347 = vld [vmem:[#allocation2 + $0x30] sm:$0xff]
        %v1348 = vld [vmem:[#allocation2 + $0x38] sm:$0xff]
        %v1349 = vld [vmem:[#allocation2 + $0x40] sm:$0xff]
        %v1350 = vld [vmem:[#allocation2 + $0x48] sm:$0xff]
        %v1351 = vld [vmem:[#allocation2 + $0x50] sm:$0xff]
        %v1352 = vld [vmem:[#allocation2 + $0x58] sm:$0xff]
        %v1353 = vld [vmem:[#allocation2 + $0x60] sm:$0xff]
        %v1354 = vld [vmem:[#allocation2 + $0x68] sm:$0xff]
        %v1355 = vld [vmem:[#allocation2 + $0x70] sm:$0xff]
        %v1356 = vld [vmem:[#allocation2 + $0x78] sm:$0xff]
        %v1357 = vld [vmem:[#allocation2 + $0x80] sm:$0xff]
        %v1358 = vld [vmem:[#allocation2 + $0x88] sm:$0xff]
        %v1359 = vld [vmem:[#allocation2 + $0x90] sm:$0xff]
        %v1360 = vld [vmem:[#allocation2 + $0x98] sm:$0xff]
        %v1361 = vld [vmem:[#allocation2 + $0xa0] sm:$0xff]
        %v1362 = vld [vmem:[#allocation2 + $0xa8] sm:$0xff]
        %v1363 = vld [vmem:[#allocation2 + $0xb0] sm:$0xff]
        %v1364 = vld [vmem:[#allocation2 + $0xb8] sm:$0xff]
        %v1365 = vld [vmem:[#allocation2 + $0xc0] sm:$0xff]
        %v1366 = vld [vmem:[#allocation2 + $0xc8] sm:$0xff]
        %v1367 = vld [vmem:[#allocation2 + $0xd0] sm:$0xff]
        %v1368 = vld [vmem:[#allocation2 + $0xd8] sm:$0xff]
        %v1369 = vld [vmem:[#allocation2 + $0xe0] sm:$0xff]
        %v1370 = vld [vmem:[#allocation2 + $0xe8] sm:$0xff]
        %v1371 = vld [vmem:[#allocation2 + $0xf0] sm:$0xff]
        %v1372 = vld [vmem:[#allocation2 + $0xf8] sm:$0xff]
        %v1373 = vpack.c.bf16 %v1217, %v1213
        %v1374 = vpack.c.bf16 %v1218, %v1214
        %v1375 = vpack.c.bf16 %v1219, %v1215
        %v1376 = vpack.c.bf16 %v1220, %v1216
        %v1377 = vpack.c.bf16 %v1225, %v1221
        %v1378 = vpack.c.bf16 %v1226, %v1222
        %v1379 = vpack.c.bf16 %v1227, %v1223
        %v1380 = vpack.c.bf16 %v1228, %v1224
        %v1381 = vpack.c.bf16 %v1233, %v1229
        %v1382 = vpack.c.bf16 %v1234, %v1230
        %v1383 = vpack.c.bf16 %v1235, %v1231
        %v1384 = vpack.c.bf16 %v1236, %v1232
        %v1385 = vpack.c.bf16 %v1241, %v1237
        %v1386 = vpack.c.bf16 %v1242, %v1238
        %v1387 = vpack.c.bf16 %v1243, %v1239
        %v1388 = vpack.c.bf16 %v1244, %v1240
        %v1389 = vpack.c.bf16 %v1249, %v1245
        %v1390 = vpack.c.bf16 %v1250, %v1246
        %v1391 = vpack.c.bf16 %v1251, %v1247
        %v1392 = vpack.c.bf16 %v1252, %v1248
        %v1393 = vpack.c.bf16 %v1257, %v1253
        %v1394 = vpack.c.bf16 %v1258, %v1254
        %v1395 = vpack.c.bf16 %v1259, %v1255
        %v1396 = vpack.c.bf16 %v1260, %v1256
        %v1397 = vpack.c.bf16 %v1265, %v1261
        %v1398 = vpack.c.bf16 %v1266, %v1262
        %v1399 = vpack.c.bf16 %v1267, %v1263
        %v1400 = vpack.c.bf16 %v1268, %v1264
        %v1401 = vpack.c.bf16 %v1273, %v1269
        %v1402 = vpack.c.bf16 %v1274, %v1270
        %v1403 = vpack.c.bf16 %v1275, %v1271
        %v1404 = vpack.c.bf16 %v1276, %v1272
        %v1405 = vpack.c.bf16 %v1281, %v1277
        %v1406 = vpack.c.bf16 %v1282, %v1278
        %v1407 = vpack.c.bf16 %v1283, %v1279
        %v1408 = vpack.c.bf16 %v1284, %v1280
        %v1409 = vpack.c.bf16 %v1289, %v1285
        %v1410 = vpack.c.bf16 %v1290, %v1286
        %v1411 = vpack.c.bf16 %v1291, %v1287
        %v1412 = vpack.c.bf16 %v1292, %v1288
        %v1413 = vpack.c.bf16 %v1297, %v1293
        %v1414 = vpack.c.bf16 %v1298, %v1294
        %v1415 = vpack.c.bf16 %v1299, %v1295
        %v1416 = vpack.c.bf16 %v1300, %v1296
        %v1417 = vpack.c.bf16 %v1305, %v1301
        %v1418 = vpack.c.bf16 %v1306, %v1302
        %v1419 = vpack.c.bf16 %v1307, %v1303
        %v1420 = vpack.c.bf16 %v1308, %v1304
        %v1421 = vpack.c.bf16 %v1313, %v1309
        %v1422 = vpack.c.bf16 %v1314, %v1310
        %v1423 = vpack.c.bf16 %v1315, %v1311
        %v1424 = vpack.c.bf16 %v1316, %v1312
        %v1425 = vpack.c.bf16 %v1321, %v1317
        %v1426 = vpack.c.bf16 %v1322, %v1318
        %v1427 = vpack.c.bf16 %v1323, %v1319
        %v1428 = vpack.c.bf16 %v1324, %v1320
        %v1429 = vpack.c.bf16 %v1329, %v1325
        %v1430 = vpack.c.bf16 %v1330, %v1326
        %v1431 = vpack.c.bf16 %v1331, %v1327
        %v1432 = vpack.c.bf16 %v1332, %v1328
        %v1433 = vpack.c.bf16 %v1337, %v1333
        %v1434 = vpack.c.bf16 %v1338, %v1334
        %v1435 = vpack.c.bf16 %v1339, %v1335
        %v1436 = vpack.c.bf16 %v1340, %v1336
        %v1437 = vld [vmem:[#allocation8] sm:$0xf]
        %v1438 = vld [vmem:[#allocation8 + $0x4] sm:$0xf]
        %v1439 = vld [vmem:[#allocation8 + $0x8] sm:$0xf]
        %v1440 = vld [vmem:[#allocation8 + $0xc] sm:$0xf]
        %v1441 = vld [vmem:[#allocation8 + $0x10] sm:$0xf]
        %v1442 = vld [vmem:[#allocation8 + $0x14] sm:$0xf]
        %v1443 = vld [vmem:[#allocation8 + $0x18] sm:$0xf]
        %v1444 = vld [vmem:[#allocation8 + $0x1c] sm:$0xf]
        %v1445 = vld [vmem:[#allocation8 + $0x20] sm:$0xf]
        %v1446 = vld [vmem:[#allocation8 + $0x24] sm:$0xf]
        %v1447 = vld [vmem:[#allocation8 + $0x28] sm:$0xf]
        %v1448 = vld [vmem:[#allocation8 + $0x2c] sm:$0xf]
        %v1449 = vld [vmem:[#allocation8 + $0x30] sm:$0xf]
        %v1450 = vld [vmem:[#allocation8 + $0x34] sm:$0xf]
        %v1451 = vld [vmem:[#allocation8 + $0x38] sm:$0xf]
        %v1452 = vld [vmem:[#allocation8 + $0x3c] sm:$0xf]
        %v1453 = vld [vmem:[#allocation8 + $0x40] sm:$0xf]
        %v1454 = vld [vmem:[#allocation8 + $0x44] sm:$0xf]
        %v1455 = vld [vmem:[#allocation8 + $0x48] sm:$0xf]
        %v1456 = vld [vmem:[#allocation8 + $0x4c] sm:$0xf]
        %v1457 = vld [vmem:[#allocation8 + $0x50] sm:$0xf]
        %v1458 = vld [vmem:[#allocation8 + $0x54] sm:$0xf]
        %v1459 = vld [vmem:[#allocation8 + $0x58] sm:$0xf]
        %v1460 = vld [vmem:[#allocation8 + $0x5c] sm:$0xf]
        %v1461 = vld [vmem:[#allocation8 + $0x60] sm:$0xf]
        %v1462 = vld [vmem:[#allocation8 + $0x64] sm:$0xf]
        %v1463 = vld [vmem:[#allocation8 + $0x68] sm:$0xf]
        %v1464 = vld [vmem:[#allocation8 + $0x6c] sm:$0xf]
        %v1465 = vld [vmem:[#allocation8 + $0x70] sm:$0xf]
        %v1466 = vld [vmem:[#allocation8 + $0x74] sm:$0xf]
        %v1467 = vld [vmem:[#allocation8 + $0x78] sm:$0xf]
        %v1468 = vld [vmem:[#allocation8 + $0x7c] sm:$0xf]
        %v1469 = vld [vmem:[#allocation8 + $0x80] sm:$0xf]
        %v1470 = vld [vmem:[#allocation8 + $0x84] sm:$0xf]
        %v1471 = vld [vmem:[#allocation8 + $0x88] sm:$0xf]
        %v1472 = vld [vmem:[#allocation8 + $0x8c] sm:$0xf]
        %v1473 = vld [vmem:[#allocation8 + $0x90] sm:$0xf]
        %v1474 = vld [vmem:[#allocation8 + $0x94] sm:$0xf]
        %v1475 = vld [vmem:[#allocation8 + $0x98] sm:$0xf]
        %v1476 = vld [vmem:[#allocation8 + $0x9c] sm:$0xf]
        %v1477 = vld [vmem:[#allocation8 + $0xa0] sm:$0xf]
        %v1478 = vld [vmem:[#allocation8 + $0xa4] sm:$0xf]
        %v1479 = vld [vmem:[#allocation8 + $0xa8] sm:$0xf]
        %v1480 = vld [vmem:[#allocation8 + $0xac] sm:$0xf]
        %v1481 = vld [vmem:[#allocation8 + $0xb0] sm:$0xf]
        %v1482 = vld [vmem:[#allocation8 + $0xb4] sm:$0xf]
        %v1483 = vld [vmem:[#allocation8 + $0xb8] sm:$0xf]
        %v1484 = vld [vmem:[#allocation8 + $0xbc] sm:$0xf]
        %v1485 = vld [vmem:[#allocation8 + $0xc0] sm:$0xf]
        %v1486 = vld [vmem:[#allocation8 + $0xc4] sm:$0xf]
        %v1487 = vld [vmem:[#allocation8 + $0xc8] sm:$0xf]
        %v1488 = vld [vmem:[#allocation8 + $0xcc] sm:$0xf]
        %v1489 = vld [vmem:[#allocation8 + $0xd0] sm:$0xf]
        %v1490 = vld [vmem:[#allocation8 + $0xd4] sm:$0xf]
        %v1491 = vld [vmem:[#allocation8 + $0xd8] sm:$0xf]
        %v1492 = vld [vmem:[#allocation8 + $0xdc] sm:$0xf]
        %v1493 = vld [vmem:[#allocation8 + $0xe0] sm:$0xf]
        %v1494 = vld [vmem:[#allocation8 + $0xe4] sm:$0xf]
        %v1495 = vld [vmem:[#allocation8 + $0xe8] sm:$0xf]
        %v1496 = vld [vmem:[#allocation8 + $0xec] sm:$0xf]
        %v1497 = vld [vmem:[#allocation8 + $0xf0] sm:$0xf]
        %v1498 = vld [vmem:[#allocation8 + $0xf4] sm:$0xf]
        %v1499 = vld [vmem:[#allocation8 + $0xf8] sm:$0xf]
        %v1500 = vld [vmem:[#allocation8 + $0xfc] sm:$0xf]
        %v1565 = vunpack.c.l.b16 %v1437
        %v1566 = vunpack.c.l.b16 %v1438
        %v1567 = vunpack.c.l.b16 %v1439
        %v1568 = vunpack.c.l.b16 %v1440
        %v1569 = vunpack.c.l.b16 %v1441
        %v1570 = vunpack.c.l.b16 %v1442
        %v1571 = vunpack.c.l.b16 %v1443
        %v1572 = vunpack.c.l.b16 %v1444
        %v1573 = vunpack.c.l.b16 %v1445
        %v1574 = vunpack.c.l.b16 %v1446
        %v1575 = vunpack.c.l.b16 %v1447
        %v1576 = vunpack.c.l.b16 %v1448
        %v1577 = vunpack.c.l.b16 %v1449
        %v1578 = vunpack.c.l.b16 %v1450
        %v1579 = vunpack.c.l.b16 %v1451
        %v1580 = vunpack.c.l.b16 %v1452
        %v1581 = vunpack.c.l.b16 %v1453
        %v1582 = vunpack.c.l.b16 %v1454
        %v1583 = vunpack.c.l.b16 %v1455
        %v1584 = vunpack.c.l.b16 %v1456
        %v1585 = vunpack.c.l.b16 %v1457
        %v1586 = vunpack.c.l.b16 %v1458
        %v1587 = vunpack.c.l.b16 %v1459
        %v1588 = vunpack.c.l.b16 %v1460
        %v1589 = vunpack.c.l.b16 %v1461
        %v1590 = vunpack.c.l.b16 %v1462
        %v1591 = vunpack.c.l.b16 %v1463
        %v1592 = vunpack.c.l.b16 %v1464
        %v1593 = vunpack.c.l.b16 %v1465
        %v1594 = vunpack.c.l.b16 %v1466
        %v1595 = vunpack.c.l.b16 %v1467
        %v1596 = vunpack.c.l.b16 %v1468
        %v1597 = vunpack.c.l.b16 %v1469
        %v1598 = vunpack.c.l.b16 %v1470
        %v1599 = vunpack.c.l.b16 %v1471
        %v1600 = vunpack.c.l.b16 %v1472
        %v1601 = vunpack.c.l.b16 %v1473
        %v1602 = vunpack.c.l.b16 %v1474
        %v1603 = vunpack.c.l.b16 %v1475
        %v1604 = vunpack.c.l.b16 %v1476
        %v1605 = vunpack.c.l.b16 %v1477
        %v1606 = vunpack.c.l.b16 %v1478
        %v1607 = vunpack.c.l.b16 %v1479
        %v1608 = vunpack.c.l.b16 %v1480
        %v1609 = vunpack.c.l.b16 %v1481
        %v1610 = vunpack.c.l.b16 %v1482
        %v1611 = vunpack.c.l.b16 %v1483
        %v1612 = vunpack.c.l.b16 %v1484
        %v1613 = vunpack.c.l.b16 %v1485
        %v1614 = vunpack.c.l.b16 %v1486
        %v1615 = vunpack.c.l.b16 %v1487
        %v1616 = vunpack.c.l.b16 %v1488
        %v1617 = vunpack.c.l.b16 %v1489
        %v1618 = vunpack.c.l.b16 %v1490
        %v1619 = vunpack.c.l.b16 %v1491
        %v1620 = vunpack.c.l.b16 %v1492
        %v1621 = vunpack.c.l.b16 %v1493
        %v1622 = vunpack.c.l.b16 %v1494
        %v1623 = vunpack.c.l.b16 %v1495
        %v1624 = vunpack.c.l.b16 %v1496
        %v1625 = vunpack.c.l.b16 %v1497
        %v1626 = vunpack.c.l.b16 %v1498
        %v1627 = vunpack.c.l.b16 %v1499
        %v1628 = vunpack.c.l.b16 %v1500
        %v1629 = vpack.c.b16 %v1566, %v1565
        %v1630 = vpack.c.b16 %v1568, %v1567
        %v1631 = vpack.c.b16 %v1570, %v1569
        %v1632 = vpack.c.b16 %v1572, %v1571
        %v1633 = vpack.c.b16 %v1574, %v1573
        %v1634 = vpack.c.b16 %v1576, %v1575
        %v1635 = vpack.c.b16 %v1578, %v1577
        %v1636 = vpack.c.b16 %v1580, %v1579
        %v1637 = vpack.c.b16 %v1582, %v1581
        %v1638 = vpack.c.b16 %v1584, %v1583
        %v1639 = vpack.c.b16 %v1586, %v1585
        %v1640 = vpack.c.b16 %v1588, %v1587
        %v1641 = vpack.c.b16 %v1590, %v1589
        %v1642 = vpack.c.b16 %v1592, %v1591
        %v1643 = vpack.c.b16 %v1594, %v1593
        %v1644 = vpack.c.b16 %v1596, %v1595
        %v1645 = vpack.c.b16 %v1598, %v1597
        %v1646 = vpack.c.b16 %v1600, %v1599
        %v1647 = vpack.c.b16 %v1602, %v1601
        %v1648 = vpack.c.b16 %v1604, %v1603
        %v1649 = vpack.c.b16 %v1606, %v1605
        %v1650 = vpack.c.b16 %v1608, %v1607
        %v1651 = vpack.c.b16 %v1610, %v1609
        %v1652 = vpack.c.b16 %v1612, %v1611
        %v1653 = vpack.c.b16 %v1614, %v1613
        %v1654 = vpack.c.b16 %v1616, %v1615
        %v1655 = vpack.c.b16 %v1618, %v1617
        %v1656 = vpack.c.b16 %v1620, %v1619
        %v1657 = vpack.c.b16 %v1622, %v1621
        %v1658 = vpack.c.b16 %v1624, %v1623
        %v1659 = vpack.c.b16 %v1626, %v1625
        %v1660 = vpack.c.b16 %v1628, %v1627
        %1693 = vmatprep.subr.bf16.mxu0 0
        %1694 = vmatpush1.bf16.msra.mxu0 %v1629
        %1695 = vmatprep.subr.bf16.mxu0 0
        %1696 = vmatpush1.bf16.msra.mxu0 %v1630
        %1697 = vmatprep.subr.bf16.mxu0 0
        %1698 = vmatpush1.bf16.msra.mxu0 %v1631
        %1699 = vmatprep.subr.bf16.mxu0 0
        %1700 = vmatpush1.bf16.msra.mxu0 %v1632
        %1701 = vmatprep.subr.bf16.mxu0 0
        %1702 = vmatpush1.bf16.msra.mxu0 %v1633
        %1703 = vmatprep.subr.bf16.mxu0 0
        %1704 = vmatpush1.bf16.msra.mxu0 %v1634
        %1705 = vmatprep.subr.bf16.mxu0 0
        %1706 = vmatpush1.bf16.msra.mxu0 %v1635
        %1707 = vmatprep.subr.bf16.mxu0 0
        %1708 = vmatpush1.bf16.msra.mxu0 %v1636
        %1709 = vmatprep.subr.bf16.mxu0 0
        %1710 = vmatpush1.bf16.msra.mxu0 %v1637
        %1711 = vmatprep.subr.bf16.mxu0 0
        %1712 = vmatpush1.bf16.msra.mxu0 %v1638
        %1713 = vmatprep.subr.bf16.mxu0 0
        %1714 = vmatpush1.bf16.msra.mxu0 %v1639
        %1715 = vmatprep.subr.bf16.mxu0 0
        %1716 = vmatpush1.bf16.msra.mxu0 %v1640
        %1717 = vmatprep.subr.bf16.mxu0 0
        %1718 = vmatpush1.bf16.msra.mxu0 %v1641
        %1719 = vmatprep.subr.bf16.mxu0 0
        %1720 = vmatpush1.bf16.msra.mxu0 %v1642
        %1721 = vmatprep.subr.bf16.mxu0 0
        %1722 = vmatpush1.bf16.msra.mxu0 %v1643
        %1723 = vmatprep.subr.bf16.mxu0 0
        %1724 = vmatpush1.bf16.msra.mxu0 %v1644
        %1725 = vmatprep.mubr.bf16.mxu0 %v1374
        %1726 = vmatmul.mubr.bf16.gmra.mrb[0].mxu0 %v1373
        %v1727 = vpop.f32.mrb[0].mxu0
        %v1728 = vadd.f32 0.0, %v1727
        %v1729 = vpop.f32.mrb[0].mxu0
        %v1730 = vpop.f32.mrb[0].mxu0
        %v1731 = vadd.f32 0.0, %v1730
        %v1732 = vpop.f32.mrb[0].mxu0
        %1733 = vmatprep.mubr.bf16.mxu0 %v1378
        %1734 = vmatmul.mubr.bf16.gmra.mrb[0].mxu0 %v1377
        %v1735 = vpop.f32.mrb[0].mxu0
        %v1736 = vadd.f32 0.0, %v1735
        %v1737 = vpop.f32.mrb[0].mxu0
        %v1738 = vpop.f32.mrb[0].mxu0
        %v1739 = vadd.f32 0.0, %v1738
        %v1740 = vpop.f32.mrb[0].mxu0
        %1741 = vmatprep.mubr.bf16.mxu0 %v1382
        %1742 = vmatmul.mubr.bf16.gmra.mrb[0].mxu0 %v1381
        %v1743 = vpop.f32.mrb[0].mxu0
        %v1744 = vadd.f32 0.0, %v1743
        %v1745 = vpop.f32.mrb[0].mxu0
        %v1746 = vpop.f32.mrb[0].mxu0
        %v1747 = vadd.f32 0.0, %v1746
        %v1748 = vpop.f32.mrb[0].mxu0
        %1749 = vmatprep.mubr.bf16.mxu0 %v1386
        %1750 = vmatmul.mubr.bf16.gmra.mrb[0].mxu0 %v1385
        %v1751 = vpop.f32.mrb[0].mxu0
        %v1752 = vadd.f32 0.0, %v1751
        %v1753 = vpop.f32.mrb[0].mxu0
        %v1754 = vpop.f32.mrb[0].mxu0
        %v1755 = vadd.f32 0.0, %v1754
        %v1756 = vpop.f32.mrb[0].mxu0
        %1757 = vmatprep.mubr.bf16.mxu0 %v1390
        %1758 = vmatmul.mubr.bf16.gmra.mrb[0].mxu0 %v1389
        %v1759 = vpop.f32.mrb[0].mxu0
        %v1760 = vadd.f32 0.0, %v1759
        %v1761 = vpop.f32.mrb[0].mxu0
        %v1762 = vpop.f32.mrb[0].mxu0
        %v1763 = vadd.f32 0.0, %v1762
        %v1764 = vpop.f32.mrb[0].mxu0
        %1765 = vmatprep.mubr.bf16.mxu0 %v1394
        %1766 = vmatmul.mubr.bf16.gmra.mrb[0].mxu0 %v1393
        %v1767 = vpop.f32.mrb[0].mxu0
        %v1768 = vadd.f32 0.0, %v1767
        %v1769 = vpop.f32.mrb[0].mxu0
        %v1770 = vpop.f32.mrb[0].mxu0
        %v1771 = vadd.f32 0.0, %v1770
        %v1772 = vpop.f32.mrb[0].mxu0
        %1773 = vmatprep.mubr.bf16.mxu0 %v1398
        %1774 = vmatmul.mubr.bf16.gmra.mrb[0].mxu0 %v1397
        %v1775 = vpop.f32.mrb[0].mxu0
        %v1776 = vadd.f32 0.0, %v1775
        %v1777 = vpop.f32.mrb[0].mxu0
        %v1778 = vpop.f32.mrb[0].mxu0
        %v1779 = vadd.f32 0.0, %v1778
        %v1780 = vpop.f32.mrb[0].mxu0
        %1781 = vmatprep.mubr.bf16.mxu0 %v1402
        %1782 = vmatmul.mubr.bf16.gmra.mrb[0].mxu0 %v1401
        %v1783 = vpop.f32.mrb[0].mxu0
        %v1784 = vadd.f32 0.0, %v1783
        %v1785 = vpop.f32.mrb[0].mxu0
        %v1786 = vpop.f32.mrb[0].mxu0
        %v1787 = vadd.f32 0.0, %v1786
        %v1788 = vpop.f32.mrb[0].mxu0
        %1789 = vmatprep.mubr.bf16.mxu0 %v1406
        %1790 = vmatmul.mubr.bf16.gmra.mrb[0].mxu0 %v1405
        %v1791 = vpop.f32.mrb[0].mxu0
        %v1792 = vadd.f32 0.0, %v1791
        %v1793 = vpop.f32.mrb[0].mxu0
        %v1794 = vpop.f32.mrb[0].mxu0
        %v1795 = vadd.f32 0.0, %v1794
        %v1796 = vpop.f32.mrb[0].mxu0
        %1797 = vmatprep.mubr.bf16.mxu0 %v1410
        %1798 = vmatmul.mubr.bf16.gmra.mrb[0].mxu0 %v1409
        %v1799 = vpop.f32.mrb[0].mxu0
        %v1800 = vadd.f32 0.0, %v1799
        %v1801 = vpop.f32.mrb[0].mxu0
        %v1802 = vpop.f32.mrb[0].mxu0
        %v1803 = vadd.f32 0.0, %v1802
        %v1804 = vpop.f32.mrb[0].mxu0
        %1805 = vmatprep.mubr.bf16.mxu0 %v1414
        %1806 = vmatmul.mubr.bf16.gmra.mrb[0].mxu0 %v1413
        %v1807 = vpop.f32.mrb[0].mxu0
        %v1808 = vadd.f32 0.0, %v1807
        %v1809 = vpop.f32.mrb[0].mxu0
        %v1810 = vpop.f32.mrb[0].mxu0
        %v1811 = vadd.f32 0.0, %v1810
        %v1812 = vpop.f32.mrb[0].mxu0
        %1813 = vmatprep.mubr.bf16.mxu0 %v1418
        %1814 = vmatmul.mubr.bf16.gmra.mrb[0].mxu0 %v1417
        %v1815 = vpop.f32.mrb[0].mxu0
        %v1816 = vadd.f32 0.0, %v1815
        %v1817 = vpop.f32.mrb[0].mxu0
        %v1818 = vpop.f32.mrb[0].mxu0
        %v1819 = vadd.f32 0.0, %v1818
        %v1820 = vpop.f32.mrb[0].mxu0
        %1821 = vmatprep.mubr.bf16.mxu0 %v1422
        %1822 = vmatmul.mubr.bf16.gmra.mrb[0].mxu0 %v1421
        %v1823 = vpop.f32.mrb[0].mxu0
        %v1824 = vadd.f32 0.0, %v1823
        %v1825 = vpop.f32.mrb[0].mxu0
        %v1826 = vpop.f32.mrb[0].mxu0
        %v1827 = vadd.f32 0.0, %v1826
        %v1828 = vpop.f32.mrb[0].mxu0
        %1829 = vmatprep.mubr.bf16.mxu0 %v1426
        %1830 = vmatmul.mubr.bf16.gmra.mrb[0].mxu0 %v1425
        %v1831 = vpop.f32.mrb[0].mxu0
        %v1832 = vadd.f32 0.0, %v1831
        %v1833 = vpop.f32.mrb[0].mxu0
        %v1834 = vpop.f32.mrb[0].mxu0
        %v1835 = vadd.f32 0.0, %v1834
        %v1836 = vpop.f32.mrb[0].mxu0
        %1837 = vmatprep.mubr.bf16.mxu0 %v1430
        %1838 = vmatmul.mubr.bf16.gmra.mrb[0].mxu0 %v1429
        %v1839 = vpop.f32.mrb[0].mxu0
        %v1840 = vadd.f32 0.0, %v1839
        %v1841 = vpop.f32.mrb[0].mxu0
        %v1842 = vpop.f32.mrb[0].mxu0
        %v1843 = vadd.f32 0.0, %v1842
        %v1844 = vpop.f32.mrb[0].mxu0
        %1845 = vmatprep.mubr.bf16.mxu0 %v1434
        %1846 = vmatmul.mubr.bf16.gmra.mrb[0].mxu0 %v1433
        %v1847 = vpop.f32.mrb[0].mxu0
        %v1848 = vadd.f32 0.0, %v1847
        %v1849 = vpop.f32.mrb[0].mxu0
        %v1850 = vpop.f32.mrb[0].mxu0
        %v1851 = vadd.f32 0.0, %v1850
        %v1852 = vpop.f32.mrb[0].mxu0
        %1853 = vdwg.mxu0
        %1854 = vmatprep.subr.bf16.mxu0 0
        %1855 = vmatpush1.bf16.msra.mxu0 %v1645
        %1856 = vmatprep.subr.bf16.mxu0 0
        %1857 = vmatpush1.bf16.msra.mxu0 %v1646
        %1858 = vmatprep.subr.bf16.mxu0 0
        %1859 = vmatpush1.bf16.msra.mxu0 %v1647
        %1860 = vmatprep.subr.bf16.mxu0 0
        %1861 = vmatpush1.bf16.msra.mxu0 %v1648
        %1862 = vmatprep.subr.bf16.mxu0 0
        %1863 = vmatpush1.bf16.msra.mxu0 %v1649
        %1864 = vmatprep.subr.bf16.mxu0 0
        %1865 = vmatpush1.bf16.msra.mxu0 %v1650
        %1866 = vmatprep.subr.bf16.mxu0 0
        %1867 = vmatpush1.bf16.msra.mxu0 %v1651
        %1868 = vmatprep.subr.bf16.mxu0 0
        %1869 = vmatpush1.bf16.msra.mxu0 %v1652
        %1870 = vmatprep.subr.bf16.mxu0 0
        %1871 = vmatpush1.bf16.msra.mxu0 %v1653
        %1872 = vmatprep.subr.bf16.mxu0 0
        %1873 = vmatpush1.bf16.msra.mxu0 %v1654
        %1874 = vmatprep.subr.bf16.mxu0 0
        %1875 = vmatpush1.bf16.msra.mxu0 %v1655
        %1876 = vmatprep.subr.bf16.mxu0 0
        %1877 = vmatpush1.bf16.msra.mxu0 %v1656
        %1878 = vmatprep.subr.bf16.mxu0 0
        %1879 = vmatpush1.bf16.msra.mxu0 %v1657
        %1880 = vmatprep.subr.bf16.mxu0 0
        %1881 = vmatpush1.bf16.msra.mxu0 %v1658
        %1882 = vmatprep.subr.bf16.mxu0 0
        %1883 = vmatpush1.bf16.msra.mxu0 %v1659
        %1884 = vmatprep.subr.bf16.mxu0 0
        %1885 = vmatpush1.bf16.msra.mxu0 %v1660
        %1886 = vmatprep.mubr.bf16.mxu0 %v1376
        %1887 = vmatmul.mubr.bf16.gmra.mrb[0].mxu0 %v1375
        %v1888 = vpop.f32.mrb[0].mxu0
        %v1889 = vadd.f32 %v1728, %v1888
        %v1890 = vpop.f32.mrb[0].mxu0
        %v1891 = vpop.f32.mrb[0].mxu0
        %v1892 = vadd.f32 %v1731, %v1891
        %v1893 = vpop.f32.mrb[0].mxu0
        %1894 = vmatprep.mubr.bf16.mxu0 %v1380
        %1895 = vmatmul.mubr.bf16.gmra.mrb[0].mxu0 %v1379
        %v1896 = vpop.f32.mrb[0].mxu0
        %v1897 = vadd.f32 %v1736, %v1896
        %v1898 = vpop.f32.mrb[0].mxu0
        %v1899 = vpop.f32.mrb[0].mxu0
        %v1900 = vadd.f32 %v1739, %v1899
        %v1901 = vpop.f32.mrb[0].mxu0
        %1902 = vmatprep.mubr.bf16.mxu0 %v1384
        %1903 = vmatmul.mubr.bf16.gmra.mrb[0].mxu0 %v1383
        %v1904 = vpop.f32.mrb[0].mxu0
        %v1905 = vadd.f32 %v1744, %v1904
        %v1906 = vpop.f32.mrb[0].mxu0
        %v1907 = vpop.f32.mrb[0].mxu0
        %v1908 = vadd.f32 %v1747, %v1907
        %v1909 = vpop.f32.mrb[0].mxu0
        %1910 = vmatprep.mubr.bf16.mxu0 %v1388
        %1911 = vmatmul.mubr.bf16.gmra.mrb[0].mxu0 %v1387
        %v1912 = vpop.f32.mrb[0].mxu0
        %v1913 = vadd.f32 %v1752, %v1912
        %v1914 = vpop.f32.mrb[0].mxu0
        %v1915 = vpop.f32.mrb[0].mxu0
        %v1916 = vadd.f32 %v1755, %v1915
        %v1917 = vpop.f32.mrb[0].mxu0
        %1918 = vmatprep.mubr.bf16.mxu0 %v1392
        %1919 = vmatmul.mubr.bf16.gmra.mrb[0].mxu0 %v1391
        %v1920 = vpop.f32.mrb[0].mxu0
        %v1921 = vadd.f32 %v1760, %v1920
        %v1922 = vpop.f32.mrb[0].mxu0
        %v1923 = vpop.f32.mrb[0].mxu0
        %v1924 = vadd.f32 %v1763, %v1923
        %v1925 = vpop.f32.mrb[0].mxu0
        %1926 = vmatprep.mubr.bf16.mxu0 %v1396
        %1927 = vmatmul.mubr.bf16.gmra.mrb[0].mxu0 %v1395
        %v1928 = vpop.f32.mrb[0].mxu0
        %v1929 = vadd.f32 %v1768, %v1928
        %v1930 = vpop.f32.mrb[0].mxu0
        %v1931 = vpop.f32.mrb[0].mxu0
        %v1932 = vadd.f32 %v1771, %v1931
        %v1933 = vpop.f32.mrb[0].mxu0
        %1934 = vmatprep.mubr.bf16.mxu0 %v1400
        %1935 = vmatmul.mubr.bf16.gmra.mrb[0].mxu0 %v1399
        %v1936 = vpop.f32.mrb[0].mxu0
        %v1937 = vadd.f32 %v1776, %v1936
        %v1938 = vpop.f32.mrb[0].mxu0
        %v1939 = vpop.f32.mrb[0].mxu0
        %v1940 = vadd.f32 %v1779, %v1939
        %v1941 = vpop.f32.mrb[0].mxu0
        %1942 = vmatprep.mubr.bf16.mxu0 %v1404
        %1943 = vmatmul.mubr.bf16.gmra.mrb[0].mxu0 %v1403
        %v1944 = vpop.f32.mrb[0].mxu0
        %v1945 = vadd.f32 %v1784, %v1944
        %v1946 = vpop.f32.mrb[0].mxu0
        %v1947 = vpop.f32.mrb[0].mxu0
        %v1948 = vadd.f32 %v1787, %v1947
        %v1949 = vpop.f32.mrb[0].mxu0
        %1950 = vmatprep.mubr.bf16.mxu0 %v1408
        %1951 = vmatmul.mubr.bf16.gmra.mrb[0].mxu0 %v1407
        %v1952 = vpop.f32.mrb[0].mxu0
        %v1953 = vadd.f32 %v1792, %v1952
        %v1954 = vpop.f32.mrb[0].mxu0
        %v1955 = vpop.f32.mrb[0].mxu0
        %v1956 = vadd.f32 %v1795, %v1955
        %v1957 = vpop.f32.mrb[0].mxu0
        %1958 = vmatprep.mubr.bf16.mxu0 %v1412
        %1959 = vmatmul.mubr.bf16.gmra.mrb[0].mxu0 %v1411
        %v1960 = vpop.f32.mrb[0].mxu0
        %v1961 = vadd.f32 %v1800, %v1960
        %v1962 = vpop.f32.mrb[0].mxu0
        %v1963 = vpop.f32.mrb[0].mxu0
        %v1964 = vadd.f32 %v1803, %v1963
        %v1965 = vpop.f32.mrb[0].mxu0
        %1966 = vmatprep.mubr.bf16.mxu0 %v1416
        %1967 = vmatmul.mubr.bf16.gmra.mrb[0].mxu0 %v1415
        %v1968 = vpop.f32.mrb[0].mxu0
        %v1969 = vadd.f32 %v1808, %v1968
        %v1970 = vpop.f32.mrb[0].mxu0
        %v1971 = vpop.f32.mrb[0].mxu0
        %v1972 = vadd.f32 %v1811, %v1971
        %v1973 = vpop.f32.mrb[0].mxu0
        %1974 = vmatprep.mubr.bf16.mxu0 %v1420
        %1975 = vmatmul.mubr.bf16.gmra.mrb[0].mxu0 %v1419
        %v1976 = vpop.f32.mrb[0].mxu0
        %v1977 = vadd.f32 %v1816, %v1976
        %v1978 = vpop.f32.mrb[0].mxu0
        %v1979 = vpop.f32.mrb[0].mxu0
        %v1980 = vadd.f32 %v1819, %v1979
        %v1981 = vpop.f32.mrb[0].mxu0
        %1982 = vmatprep.mubr.bf16.mxu0 %v1424
        %1983 = vmatmul.mubr.bf16.gmra.mrb[0].mxu0 %v1423
        %v1984 = vpop.f32.mrb[0].mxu0
        %v1985 = vadd.f32 %v1824, %v1984
        %v1986 = vpop.f32.mrb[0].mxu0
        %v1987 = vpop.f32.mrb[0].mxu0
        %v1988 = vadd.f32 %v1827, %v1987
        %v1989 = vpop.f32.mrb[0].mxu0
        %1990 = vmatprep.mubr.bf16.mxu0 %v1428
        %1991 = vmatmul.mubr.bf16.gmra.mrb[0].mxu0 %v1427
        %v1992 = vpop.f32.mrb[0].mxu0
        %v1993 = vadd.f32 %v1832, %v1992
        %v1994 = vpop.f32.mrb[0].mxu0
        %v1995 = vpop.f32.mrb[0].mxu0
        %v1996 = vadd.f32 %v1835, %v1995
        %v1997 = vpop.f32.mrb[0].mxu0
        %1998 = vmatprep.mubr.bf16.mxu0 %v1432
        %1999 = vmatmul.mubr.bf16.gmra.mrb[0].mxu0 %v1431
        %v2000 = vpop.f32.mrb[0].mxu0
        %v2001 = vadd.f32 %v1840, %v2000
        %v2002 = vpop.f32.mrb[0].mxu0
        %v2003 = vpop.f32.mrb[0].mxu0
        %v2004 = vadd.f32 %v1843, %v2003
        %v2005 = vpop.f32.mrb[0].mxu0
        %2006 = vmatprep.mubr.bf16.mxu0 %v1436
        %2007 = vmatmul.mubr.bf16.gmra.mrb[0].mxu0 %v1435
        %v2008 = vpop.f32.mrb[0].mxu0
        %v2009 = vadd.f32 %v1848, %v2008
        %v2010 = vpop.f32.mrb[0].mxu0
        %v2011 = vpop.f32.mrb[0].mxu0
        %v2012 = vadd.f32 %v1851, %v2011
        %v2013 = vpop.f32.mrb[0].mxu0
        %2014 = vdwg.mxu0
        %v2015 = vadd.f32 %v1341, %v1889
        %v2016 = vadd.f32 %v1342, %v1892
        %v2017 = vadd.f32 %v1343, %v1897
        %v2018 = vadd.f32 %v1344, %v1900
        %v2019 = vadd.f32 %v1345, %v1905
        %v2020 = vadd.f32 %v1346, %v1908
        %v2021 = vadd.f32 %v1347, %v1913
        %v2022 = vadd.f32 %v1348, %v1916
        %v2023 = vadd.f32 %v1349, %v1921
        %v2024 = vadd.f32 %v1350, %v1924
        %v2025 = vadd.f32 %v1351, %v1929
        %v2026 = vadd.f32 %v1352, %v1932
        %v2027 = vadd.f32 %v1353, %v1937
        %v2028 = vadd.f32 %v1354, %v1940
        %v2029 = vadd.f32 %v1355, %v1945
        %v2030 = vadd.f32 %v1356, %v1948
        %v2031 = vadd.f32 %v1357, %v1953
        %v2032 = vadd.f32 %v1358, %v1956
        %v2033 = vadd.f32 %v1359, %v1961
        %v2034 = vadd.f32 %v1360, %v1964
        %v2035 = vadd.f32 %v1361, %v1969
        %v2036 = vadd.f32 %v1362, %v1972
        %v2037 = vadd.f32 %v1363, %v1977
        %v2038 = vadd.f32 %v1364, %v1980
        %v2039 = vadd.f32 %v1365, %v1985
        %v2040 = vadd.f32 %v1366, %v1988
        %v2041 = vadd.f32 %v1367, %v1993
        %v2042 = vadd.f32 %v1368, %v1996
        %v2043 = vadd.f32 %v1369, %v2001
        %v2044 = vadd.f32 %v1370, %v2004
        %v2045 = vadd.f32 %v1371, %v2009
        %v2046 = vadd.f32 %v1372, %v2012
        %2047 = vst [vmem:[#allocation2] sm:$0xff] %v2015
        %2048 = vst [vmem:[#allocation2 + $0x8] sm:$0xff] %v2016
        %2049 = vst [vmem:[#allocation2 + $0x10] sm:$0xff] %v2017
        %2050 = vst [vmem:[#allocation2 + $0x18] sm:$0xff] %v2018
        %2051 = vst [vmem:[#allocation2 + $0x20] sm:$0xff] %v2019
        %2052 = vst [vmem:[#allocation2 + $0x28] sm:$0xff] %v2020
        %2053 = vst [vmem:[#allocation2 + $0x30] sm:$0xff] %v2021
        %2054 = vst [vmem:[#allocation2 + $0x38] sm:$0xff] %v2022
        %2055 = vst [vmem:[#allocation2 + $0x40] sm:$0xff] %v2023
        %2056 = vst [vmem:[#allocation2 + $0x48] sm:$0xff] %v2024
        %2057 = vst [vmem:[#allocation2 + $0x50] sm:$0xff] %v2025
        %2058 = vst [vmem:[#allocation2 + $0x58] sm:$0xff] %v2026
        %2059 = vst [vmem:[#allocation2 + $0x60] sm:$0xff] %v2027
        %2060 = vst [vmem:[#allocation2 + $0x68] sm:$0xff] %v2028
        %2061 = vst [vmem:[#allocation2 + $0x70] sm:$0xff] %v2029
        %2062 = vst [vmem:[#allocation2 + $0x78] sm:$0xff] %v2030
        %2063 = vst [vmem:[#allocation2 + $0x80] sm:$0xff] %v2031
        %2064 = vst [vmem:[#allocation2 + $0x88] sm:$0xff] %v2032
        %2065 = vst [vmem:[#allocation2 + $0x90] sm:$0xff] %v2033
        %2066 = vst [vmem:[#allocation2 + $0x98] sm:$0xff] %v2034
        %2067 = vst [vmem:[#allocation2 + $0xa0] sm:$0xff] %v2035
        %2068 = vst [vmem:[#allocation2 + $0xa8] sm:$0xff] %v2036
        %2069 = vst [vmem:[#allocation2 + $0xb0] sm:$0xff] %v2037
        %2070 = vst [vmem:[#allocation2 + $0xb8] sm:$0xff] %v2038
        %2071 = vst [vmem:[#allocation2 + $0xc0] sm:$0xff] %v2039
        %2072 = vst [vmem:[#allocation2 + $0xc8] sm:$0xff] %v2040
        %2073 = vst [vmem:[#allocation2 + $0xd0] sm:$0xff] %v2041
        %2074 = vst [vmem:[#allocation2 + $0xd8] sm:$0xff] %v2042
        %2075 = vst [vmem:[#allocation2 + $0xe0] sm:$0xff] %v2043
        %2076 = vst [vmem:[#allocation2 + $0xe8] sm:$0xff] %v2044
        %2077 = vst [vmem:[#allocation2 + $0xf0] sm:$0xff] %v2045
        %2078 = vst [vmem:[#allocation2 + $0xf8] sm:$0xff] %v2046
        // Predicated region
        $region65: #{tpu_custom_call.1} parent=47 // pred_check
          %p2079 = pneg %p410
        $region66: #{tpu_custom_call.1} parent=47 // pred_check_branch
          %2081 = sbr.rel (%p2079) target = $region68
        $region67: #{tpu_custom_call.1} parent=47 // pred_region
          %v2082 = vld [vmem:[#allocation2] sm:$0xff]
          %v2083 = vld [vmem:[#allocation2 + $0x8] sm:$0xff]
          %v2084 = vld [vmem:[#allocation2 + $0x10] sm:$0xff]
          %v2085 = vld [vmem:[#allocation2 + $0x18] sm:$0xff]
          %v2086 = vld [vmem:[#allocation2 + $0x20] sm:$0xff]
          %v2087 = vld [vmem:[#allocation2 + $0x28] sm:$0xff]
          %v2088 = vld [vmem:[#allocation2 + $0x30] sm:$0xff]
          %v2089 = vld [vmem:[#allocation2 + $0x38] sm:$0xff]
          %v2090 = vld [vmem:[#allocation2 + $0x40] sm:$0xff]
          %v2091 = vld [vmem:[#allocation2 + $0x48] sm:$0xff]
          %v2092 = vld [vmem:[#allocation2 + $0x50] sm:$0xff]
          %v2093 = vld [vmem:[#allocation2 + $0x58] sm:$0xff]
          %v2094 = vld [vmem:[#allocation2 + $0x60] sm:$0xff]
          %v2095 = vld [vmem:[#allocation2 + $0x68] sm:$0xff]
          %v2096 = vld [vmem:[#allocation2 + $0x70] sm:$0xff]
          %v2097 = vld [vmem:[#allocation2 + $0x78] sm:$0xff]
          %v2098 = vld [vmem:[#allocation2 + $0x80] sm:$0xff]
          %v2099 = vld [vmem:[#allocation2 + $0x88] sm:$0xff]
          %v2100 = vld [vmem:[#allocation2 + $0x90] sm:$0xff]
          %v2101 = vld [vmem:[#allocation2 + $0x98] sm:$0xff]
          %v2102 = vld [vmem:[#allocation2 + $0xa0] sm:$0xff]
          %v2103 = vld [vmem:[#allocation2 + $0xa8] sm:$0xff]
          %v2104 = vld [vmem:[#allocation2 + $0xb0] sm:$0xff]
          %v2105 = vld [vmem:[#allocation2 + $0xb8] sm:$0xff]
          %v2106 = vld [vmem:[#allocation2 + $0xc0] sm:$0xff]
          %v2107 = vld [vmem:[#allocation2 + $0xc8] sm:$0xff]
          %v2108 = vld [vmem:[#allocation2 + $0xd0] sm:$0xff]
          %v2109 = vld [vmem:[#allocation2 + $0xd8] sm:$0xff]
          %v2110 = vld [vmem:[#allocation2 + $0xe0] sm:$0xff]
          %v2111 = vld [vmem:[#allocation2 + $0xe8] sm:$0xff]
          %v2112 = vld [vmem:[#allocation2 + $0xf0] sm:$0xff]
          %v2113 = vld [vmem:[#allocation2 + $0xf8] sm:$0xff]
          %2114 = vadd.xlane.f32.xlu0 %v2082
          %v2115 = vpop.xlane.xlu0 %2114
          %2116 = vadd.xlane.f32.xlu0 %v2083
          %v2117 = vpop.xlane.xlu0 %2116
          %2118 = vadd.xlane.f32.xlu0 %v2084
          %v2119 = vpop.xlane.xlu0 %2118
          %2120 = vadd.xlane.f32.xlu0 %v2085
          %v2121 = vpop.xlane.xlu0 %2120
          %2122 = vadd.xlane.f32.xlu0 %v2086
          %v2123 = vpop.xlane.xlu0 %2122
          %2124 = vadd.xlane.f32.xlu0 %v2087
          %v2125 = vpop.xlane.xlu0 %2124
          %2126 = vadd.xlane.f32.xlu0 %v2088
          %v2127 = vpop.xlane.xlu0 %2126
          %2128 = vadd.xlane.f32.xlu0 %v2089
          %v2129 = vpop.xlane.xlu0 %2128
          %2130 = vadd.xlane.f32.xlu0 %v2090
          %v2131 = vpop.xlane.xlu0 %2130
          %2132 = vadd.xlane.f32.xlu0 %v2091
          %v2133 = vpop.xlane.xlu0 %2132
          %2134 = vadd.xlane.f32.xlu0 %v2092
          %v2135 = vpop.xlane.xlu0 %2134
          %2136 = vadd.xlane.f32.xlu0 %v2093
          %v2137 = vpop.xlane.xlu0 %2136
          %2138 = vadd.xlane.f32.xlu0 %v2094
          %v2139 = vpop.xlane.xlu0 %2138
          %2140 = vadd.xlane.f32.xlu0 %v2095
          %v2141 = vpop.xlane.xlu0 %2140
          %2142 = vadd.xlane.f32.xlu0 %v2096
          %v2143 = vpop.xlane.xlu0 %2142
          %2144 = vadd.xlane.f32.xlu0 %v2097
          %v2145 = vpop.xlane.xlu0 %2144
          %2146 = vadd.xlane.f32.xlu0 %v2098
          %v2147 = vpop.xlane.xlu0 %2146
          %2148 = vadd.xlane.f32.xlu0 %v2099
          %v2149 = vpop.xlane.xlu0 %2148
          %2150 = vadd.xlane.f32.xlu0 %v2100
          %v2151 = vpop.xlane.xlu0 %2150
          %2152 = vadd.xlane.f32.xlu0 %v2101
          %v2153 = vpop.xlane.xlu0 %2152
          %2154 = vadd.xlane.f32.xlu0 %v2102
          %v2155 = vpop.xlane.xlu0 %2154
          %2156 = vadd.xlane.f32.xlu0 %v2103
          %v2157 = vpop.xlane.xlu0 %2156
          %2158 = vadd.xlane.f32.xlu0 %v2104
          %v2159 = vpop.xlane.xlu0 %2158
          %2160 = vadd.xlane.f32.xlu0 %v2105
          %v2161 = vpop.xlane.xlu0 %2160
          %2162 = vadd.xlane.f32.xlu0 %v2106
          %v2163 = vpop.xlane.xlu0 %2162
          %2164 = vadd.xlane.f32.xlu0 %v2107
          %v2165 = vpop.xlane.xlu0 %2164
          %2166 = vadd.xlane.f32.xlu0 %v2108
          %v2167 = vpop.xlane.xlu0 %2166
          %2168 = vadd.xlane.f32.xlu0 %v2109
          %v2169 = vpop.xlane.xlu0 %2168
          %2170 = vadd.xlane.f32.xlu0 %v2110
          %v2171 = vpop.xlane.xlu0 %2170
          %2172 = vadd.xlane.f32.xlu0 %v2111
          %v2173 = vpop.xlane.xlu0 %2172
          %2174 = vadd.xlane.f32.xlu0 %v2112
          %v2175 = vpop.xlane.xlu0 %2174
          %2176 = vadd.xlane.f32.xlu0 %v2113
          %v2177 = vpop.xlane.xlu0 %2176
          %v2178 = vrcp.pop 128.0
          %v2179 = vmul.f32 %v2115, %v2178
          %v2180 = vmul.f32 %v2117, %v2178
          %v2181 = vmul.f32 %v2119, %v2178
          %v2182 = vmul.f32 %v2121, %v2178
          %v2183 = vmul.f32 %v2123, %v2178
          %v2184 = vmul.f32 %v2125, %v2178
          %v2185 = vmul.f32 %v2127, %v2178
          %v2186 = vmul.f32 %v2129, %v2178
          %v2187 = vmul.f32 %v2131, %v2178
          %v2188 = vmul.f32 %v2133, %v2178
          %v2189 = vmul.f32 %v2135, %v2178
          %v2190 = vmul.f32 %v2137, %v2178
          %v2191 = vmul.f32 %v2139, %v2178
          %v2192 = vmul.f32 %v2141, %v2178
          %v2193 = vmul.f32 %v2143, %v2178
          %v2194 = vmul.f32 %v2145, %v2178
          %v2195 = vmul.f32 %v2147, %v2178
          %v2196 = vmul.f32 %v2149, %v2178
          %v2197 = vmul.f32 %v2151, %v2178
          %v2198 = vmul.f32 %v2153, %v2178
          %v2199 = vmul.f32 %v2155, %v2178
          %v2200 = vmul.f32 %v2157, %v2178
          %v2201 = vmul.f32 %v2159, %v2178
          %v2202 = vmul.f32 %v2161, %v2178
          %v2203 = vmul.f32 %v2163, %v2178
          %v2204 = vmul.f32 %v2165, %v2178
          %v2205 = vmul.f32 %v2167, %v2178
          %v2206 = vmul.f32 %v2169, %v2178
          %v2207 = vmul.f32 %v2171, %v2178
          %v2208 = vmul.f32 %v2173, %v2178
          %v2209 = vmul.f32 %v2175, %v2178
          %v2210 = vmul.f32 %v2177, %v2178
          %v2211 = vsub.f32 %v2082, %v2179
          %v2212 = vsub.f32 %v2083, %v2180
          %v2213 = vsub.f32 %v2084, %v2181
          %v2214 = vsub.f32 %v2085, %v2182
          %v2215 = vsub.f32 %v2086, %v2183
          %v2216 = vsub.f32 %v2087, %v2184
          %v2217 = vsub.f32 %v2088, %v2185
          %v2218 = vsub.f32 %v2089, %v2186
          %v2219 = vsub.f32 %v2090, %v2187
          %v2220 = vsub.f32 %v2091, %v2188
          %v2221 = vsub.f32 %v2092, %v2189
          %v2222 = vsub.f32 %v2093, %v2190
          %v2223 = vsub.f32 %v2094, %v2191
          %v2224 = vsub.f32 %v2095, %v2192
          %v2225 = vsub.f32 %v2096, %v2193
          %v2226 = vsub.f32 %v2097, %v2194
          %v2227 = vsub.f32 %v2098, %v2195
          %v2228 = vsub.f32 %v2099, %v2196
          %v2229 = vsub.f32 %v2100, %v2197
          %v2230 = vsub.f32 %v2101, %v2198
          %v2231 = vsub.f32 %v2102, %v2199
          %v2232 = vsub.f32 %v2103, %v2200
          %v2233 = vsub.f32 %v2104, %v2201
          %v2234 = vsub.f32 %v2105, %v2202
          %v2235 = vsub.f32 %v2106, %v2203
          %v2236 = vsub.f32 %v2107, %v2204
          %v2237 = vsub.f32 %v2108, %v2205
          %v2238 = vsub.f32 %v2109, %v2206
          %v2239 = vsub.f32 %v2110, %v2207
          %v2240 = vsub.f32 %v2111, %v2208
          %v2241 = vsub.f32 %v2112, %v2209
          %v2242 = vsub.f32 %v2113, %v2210
          %v2243 = vmul.f32 %v2211, %v2211
          %v2244 = vmul.f32 %v2212, %v2212
          %v2245 = vmul.f32 %v2213, %v2213
          %v2246 = vmul.f32 %v2214, %v2214
          %v2247 = vmul.f32 %v2215, %v2215
          %v2248 = vmul.f32 %v2216, %v2216
          %v2249 = vmul.f32 %v2217, %v2217
          %v2250 = vmul.f32 %v2218, %v2218
          %v2251 = vmul.f32 %v2219, %v2219
          %v2252 = vmul.f32 %v2220, %v2220
          %v2253 = vmul.f32 %v2221, %v2221
          %v2254 = vmul.f32 %v2222, %v2222
          %v2255 = vmul.f32 %v2223, %v2223
          %v2256 = vmul.f32 %v2224, %v2224
          %v2257 = vmul.f32 %v2225, %v2225
          %v2258 = vmul.f32 %v2226, %v2226
          %v2259 = vmul.f32 %v2227, %v2227
          %v2260 = vmul.f32 %v2228, %v2228
          %v2261 = vmul.f32 %v2229, %v2229
          %v2262 = vmul.f32 %v2230, %v2230
          %v2263 = vmul.f32 %v2231, %v2231
          %v2264 = vmul.f32 %v2232, %v2232
          %v2265 = vmul.f32 %v2233, %v2233
          %v2266 = vmul.f32 %v2234, %v2234
          %v2267 = vmul.f32 %v2235, %v2235
          %v2268 = vmul.f32 %v2236, %v2236
          %v2269 = vmul.f32 %v2237, %v2237
          %v2270 = vmul.f32 %v2238, %v2238
          %v2271 = vmul.f32 %v2239, %v2239
          %v2272 = vmul.f32 %v2240, %v2240
          %v2273 = vmul.f32 %v2241, %v2241
          %v2274 = vmul.f32 %v2242, %v2242
          %2275 = vadd.xlane.f32.xlu0 %v2243
          %v2276 = vpop.xlane.xlu0 %2275
          %2277 = vadd.xlane.f32.xlu0 %v2244
          %v2278 = vpop.xlane.xlu0 %2277
          %2279 = vadd.xlane.f32.xlu0 %v2245
          %v2280 = vpop.xlane.xlu0 %2279
          %2281 = vadd.xlane.f32.xlu0 %v2246
          %v2282 = vpop.xlane.xlu0 %2281
          %2283 = vadd.xlane.f32.xlu0 %v2247
          %v2284 = vpop.xlane.xlu0 %2283
          %2285 = vadd.xlane.f32.xlu0 %v2248
          %v2286 = vpop.xlane.xlu0 %2285
          %2287 = vadd.xlane.f32.xlu0 %v2249
          %v2288 = vpop.xlane.xlu0 %2287
          %2289 = vadd.xlane.f32.xlu0 %v2250
          %v2290 = vpop.xlane.xlu0 %2289
          %2291 = vadd.xlane.f32.xlu0 %v2251
          %v2292 = vpop.xlane.xlu0 %2291
          %2293 = vadd.xlane.f32.xlu0 %v2252
          %v2294 = vpop.xlane.xlu0 %2293
          %2295 = vadd.xlane.f32.xlu0 %v2253
          %v2296 = vpop.xlane.xlu0 %2295
          %2297 = vadd.xlane.f32.xlu0 %v2254
          %v2298 = vpop.xlane.xlu0 %2297
          %2299 = vadd.xlane.f32.xlu0 %v2255
          %v2300 = vpop.xlane.xlu0 %2299
          %2301 = vadd.xlane.f32.xlu0 %v2256
          %v2302 = vpop.xlane.xlu0 %2301
          %2303 = vadd.xlane.f32.xlu0 %v2257
          %v2304 = vpop.xlane.xlu0 %2303
          %2305 = vadd.xlane.f32.xlu0 %v2258
          %v2306 = vpop.xlane.xlu0 %2305
          %2307 = vadd.xlane.f32.xlu0 %v2259
          %v2308 = vpop.xlane.xlu0 %2307
          %2309 = vadd.xlane.f32.xlu0 %v2260
          %v2310 = vpop.xlane.xlu0 %2309
          %2311 = vadd.xlane.f32.xlu0 %v2261
          %v2312 = vpop.xlane.xlu0 %2311
          %2313 = vadd.xlane.f32.xlu0 %v2262
          %v2314 = vpop.xlane.xlu0 %2313
          %2315 = vadd.xlane.f32.xlu0 %v2263
          %v2316 = vpop.xlane.xlu0 %2315
          %2317 = vadd.xlane.f32.xlu0 %v2264
          %v2318 = vpop.xlane.xlu0 %2317
          %2319 = vadd.xlane.f32.xlu0 %v2265
          %v2320 = vpop.xlane.xlu0 %2319
          %2321 = vadd.xlane.f32.xlu0 %v2266
          %v2322 = vpop.xlane.xlu0 %2321
          %2323 = vadd.xlane.f32.xlu0 %v2267
          %v2324 = vpop.xlane.xlu0 %2323
          %2325 = vadd.xlane.f32.xlu0 %v2268
          %v2326 = vpop.xlane.xlu0 %2325
          %2327 = vadd.xlane.f32.xlu0 %v2269
          %v2328 = vpop.xlane.xlu0 %2327
          %2329 = vadd.xlane.f32.xlu0 %v2270
          %v2330 = vpop.xlane.xlu0 %2329
          %2331 = vadd.xlane.f32.xlu0 %v2271
          %v2332 = vpop.xlane.xlu0 %2331
          %2333 = vadd.xlane.f32.xlu0 %v2272
          %v2334 = vpop.xlane.xlu0 %2333
          %2335 = vadd.xlane.f32.xlu0 %v2273
          %v2336 = vpop.xlane.xlu0 %2335
          %2337 = vadd.xlane.f32.xlu0 %v2274
          %v2338 = vpop.xlane.xlu0 %2337
          %v2339 = vmul.f32 %v2276, %v2178
          %v2340 = vmul.f32 %v2278, %v2178
          %v2341 = vmul.f32 %v2280, %v2178
          %v2342 = vmul.f32 %v2282, %v2178
          %v2343 = vmul.f32 %v2284, %v2178
          %v2344 = vmul.f32 %v2286, %v2178
          %v2345 = vmul.f32 %v2288, %v2178
          %v2346 = vmul.f32 %v2290, %v2178
          %v2347 = vmul.f32 %v2292, %v2178
          %v2348 = vmul.f32 %v2294, %v2178
          %v2349 = vmul.f32 %v2296, %v2178
          %v2350 = vmul.f32 %v2298, %v2178
          %v2351 = vmul.f32 %v2300, %v2178
          %v2352 = vmul.f32 %v2302, %v2178
          %v2353 = vmul.f32 %v2304, %v2178
          %v2354 = vmul.f32 %v2306, %v2178
          %v2355 = vmul.f32 %v2308, %v2178
          %v2356 = vmul.f32 %v2310, %v2178
          %v2357 = vmul.f32 %v2312, %v2178
          %v2358 = vmul.f32 %v2314, %v2178
          %v2359 = vmul.f32 %v2316, %v2178
          %v2360 = vmul.f32 %v2318, %v2178
          %v2361 = vmul.f32 %v2320, %v2178
          %v2362 = vmul.f32 %v2322, %v2178
          %v2363 = vmul.f32 %v2324, %v2178
          %v2364 = vmul.f32 %v2326, %v2178
          %v2365 = vmul.f32 %v2328, %v2178
          %v2366 = vmul.f32 %v2330, %v2178
          %v2367 = vmul.f32 %v2332, %v2178
          %v2368 = vmul.f32 %v2334, %v2178
          %v2369 = vmul.f32 %v2336, %v2178
          %v2370 = vmul.f32 %v2338, %v2178
          %v2371 = vadd.f32 %v2339, 1e-05
          %v2372 = vadd.f32 %v2340, 1e-05
          %v2373 = vadd.f32 %v2341, 1e-05
          %v2374 = vadd.f32 %v2342, 1e-05
          %v2375 = vadd.f32 %v2343, 1e-05
          %v2376 = vadd.f32 %v2344, 1e-05
          %v2377 = vadd.f32 %v2345, 1e-05
          %v2378 = vadd.f32 %v2346, 1e-05
          %v2379 = vadd.f32 %v2347, 1e-05
          %v2380 = vadd.f32 %v2348, 1e-05
          %v2381 = vadd.f32 %v2349, 1e-05
          %v2382 = vadd.f32 %v2350, 1e-05
          %v2383 = vadd.f32 %v2351, 1e-05
          %v2384 = vadd.f32 %v2352, 1e-05
          %v2385 = vadd.f32 %v2353, 1e-05
          %v2386 = vadd.f32 %v2354, 1e-05
          %v2387 = vadd.f32 %v2355, 1e-05
          %v2388 = vadd.f32 %v2356, 1e-05
          %v2389 = vadd.f32 %v2357, 1e-05
          %v2390 = vadd.f32 %v2358, 1e-05
          %v2391 = vadd.f32 %v2359, 1e-05
          %v2392 = vadd.f32 %v2360, 1e-05
          %v2393 = vadd.f32 %v2361, 1e-05
          %v2394 = vadd.f32 %v2362, 1e-05
          %v2395 = vadd.f32 %v2363, 1e-05
          %v2396 = vadd.f32 %v2364, 1e-05
          %v2397 = vadd.f32 %v2365, 1e-05
          %v2398 = vadd.f32 %v2366, 1e-05
          %v2399 = vadd.f32 %v2367, 1e-05
          %v2400 = vadd.f32 %v2368, 1e-05
          %v2401 = vadd.f32 %v2369, 1e-05
          %v2402 = vadd.f32 %v2370, 1e-05
          %v2403 = vrsqrt.pop %v2371
          %v2404 = vrsqrt.pop %v2372
          %v2405 = vrsqrt.pop %v2373
          %v2406 = vrsqrt.pop %v2374
          %v2407 = vrsqrt.pop %v2375
          %v2408 = vrsqrt.pop %v2376
          %v2409 = vrsqrt.pop %v2377
          %v2410 = vrsqrt.pop %v2378
          %v2411 = vrsqrt.pop %v2379
          %v2412 = vrsqrt.pop %v2380
          %v2413 = vrsqrt.pop %v2381
          %v2414 = vrsqrt.pop %v2382
          %v2415 = vrsqrt.pop %v2383
          %v2416 = vrsqrt.pop %v2384
          %v2417 = vrsqrt.pop %v2385
          %v2418 = vrsqrt.pop %v2386
          %v2419 = vrsqrt.pop %v2387
          %v2420 = vrsqrt.pop %v2388
          %v2421 = vrsqrt.pop %v2389
          %v2422 = vrsqrt.pop %v2390
          %v2423 = vrsqrt.pop %v2391
          %v2424 = vrsqrt.pop %v2392
          %v2425 = vrsqrt.pop %v2393
          %v2426 = vrsqrt.pop %v2394
          %v2427 = vrsqrt.pop %v2395
          %v2428 = vrsqrt.pop %v2396
          %v2429 = vrsqrt.pop %v2397
          %v2430 = vrsqrt.pop %v2398
          %v2431 = vrsqrt.pop %v2399
          %v2432 = vrsqrt.pop %v2400
          %v2433 = vrsqrt.pop %v2401
          %v2434 = vrsqrt.pop %v2402
          %v2435 = vmul.f32 %v2211, %v2403
          %v2436 = vmul.f32 %v2212, %v2404
          %v2437 = vmul.f32 %v2213, %v2405
          %v2438 = vmul.f32 %v2214, %v2406
          %v2439 = vmul.f32 %v2215, %v2407
          %v2440 = vmul.f32 %v2216, %v2408
          %v2441 = vmul.f32 %v2217, %v2409
          %v2442 = vmul.f32 %v2218, %v2410
          %v2443 = vmul.f32 %v2219, %v2411
          %v2444 = vmul.f32 %v2220, %v2412
          %v2445 = vmul.f32 %v2221, %v2413
          %v2446 = vmul.f32 %v2222, %v2414
          %v2447 = vmul.f32 %v2223, %v2415
          %v2448 = vmul.f32 %v2224, %v2416
          %v2449 = vmul.f32 %v2225, %v2417
          %v2450 = vmul.f32 %v2226, %v2418
          %v2451 = vmul.f32 %v2227, %v2419
          %v2452 = vmul.f32 %v2228, %v2420
          %v2453 = vmul.f32 %v2229, %v2421
          %v2454 = vmul.f32 %v2230, %v2422
          %v2455 = vmul.f32 %v2231, %v2423
          %v2456 = vmul.f32 %v2232, %v2424
          %v2457 = vmul.f32 %v2233, %v2425
          %v2458 = vmul.f32 %v2234, %v2426
          %v2459 = vmul.f32 %v2235, %v2427
          %v2460 = vmul.f32 %v2236, %v2428
          %v2461 = vmul.f32 %v2237, %v2429
          %v2462 = vmul.f32 %v2238, %v2430
          %v2463 = vmul.f32 %v2239, %v2431
          %v2464 = vmul.f32 %v2240, %v2432
          %v2465 = vmul.f32 %v2241, %v2433
          %v2466 = vmul.f32 %v2242, %v2434
          %v2467 = vld [vmem:[%s5] sm:$0x1]
          %v2469 = vlaneseq
          %v2470 = vshrl.u32 %v2469, 7
          %v2471 = vsub.s32 0, %v2470
          %v2472 = vrot.slane %v2467, %v2471
          %v2474 = vmul.f32 %v2435, %v2472
          %v2475 = vmul.f32 %v2436, %v2472
          %v2476 = vmul.f32 %v2437, %v2472
          %v2477 = vmul.f32 %v2438, %v2472
          %v2478 = vmul.f32 %v2439, %v2472
          %v2479 = vmul.f32 %v2440, %v2472
          %v2480 = vmul.f32 %v2441, %v2472
          %v2481 = vmul.f32 %v2442, %v2472
          %v2482 = vmul.f32 %v2443, %v2472
          %v2483 = vmul.f32 %v2444, %v2472
          %v2484 = vmul.f32 %v2445, %v2472
          %v2485 = vmul.f32 %v2446, %v2472
          %v2486 = vmul.f32 %v2447, %v2472
          %v2487 = vmul.f32 %v2448, %v2472
          %v2488 = vmul.f32 %v2449, %v2472
          %v2489 = vmul.f32 %v2450, %v2472
          %v2490 = vmul.f32 %v2451, %v2472
          %v2491 = vmul.f32 %v2452, %v2472
          %v2492 = vmul.f32 %v2453, %v2472
          %v2493 = vmul.f32 %v2454, %v2472
          %v2494 = vmul.f32 %v2455, %v2472
          %v2495 = vmul.f32 %v2456, %v2472
          %v2496 = vmul.f32 %v2457, %v2472
          %v2497 = vmul.f32 %v2458, %v2472
          %v2498 = vmul.f32 %v2459, %v2472
          %v2499 = vmul.f32 %v2460, %v2472
          %v2500 = vmul.f32 %v2461, %v2472
          %v2501 = vmul.f32 %v2462, %v2472
          %v2502 = vmul.f32 %v2463, %v2472
          %v2503 = vmul.f32 %v2464, %v2472
          %v2504 = vmul.f32 %v2465, %v2472
          %v2505 = vmul.f32 %v2466, %v2472
          %v2506 = vld [vmem:[%s6] sm:$0x1]
          %v2508 = vlaneseq
          %v2509 = vshrl.u32 %v2508, 7
          %v2510 = vsub.s32 0, %v2509
          %v2511 = vrot.slane %v2506, %v2510
          %v2513 = vadd.f32 %v2474, %v2511
          %v2514 = vadd.f32 %v2475, %v2511
          %v2515 = vadd.f32 %v2476, %v2511
          %v2516 = vadd.f32 %v2477, %v2511
          %v2517 = vadd.f32 %v2478, %v2511
          %v2518 = vadd.f32 %v2479, %v2511
          %v2519 = vadd.f32 %v2480, %v2511
          %v2520 = vadd.f32 %v2481, %v2511
          %v2521 = vadd.f32 %v2482, %v2511
          %v2522 = vadd.f32 %v2483, %v2511
          %v2523 = vadd.f32 %v2484, %v2511
          %v2524 = vadd.f32 %v2485, %v2511
          %v2525 = vadd.f32 %v2486, %v2511
          %v2526 = vadd.f32 %v2487, %v2511
          %v2527 = vadd.f32 %v2488, %v2511
          %v2528 = vadd.f32 %v2489, %v2511
          %v2529 = vadd.f32 %v2490, %v2511
          %v2530 = vadd.f32 %v2491, %v2511
          %v2531 = vadd.f32 %v2492, %v2511
          %v2532 = vadd.f32 %v2493, %v2511
          %v2533 = vadd.f32 %v2494, %v2511
          %v2534 = vadd.f32 %v2495, %v2511
          %v2535 = vadd.f32 %v2496, %v2511
          %v2536 = vadd.f32 %v2497, %v2511
          %v2537 = vadd.f32 %v2498, %v2511
          %v2538 = vadd.f32 %v2499, %v2511
          %v2539 = vadd.f32 %v2500, %v2511
          %v2540 = vadd.f32 %v2501, %v2511
          %v2541 = vadd.f32 %v2502, %v2511
          %v2542 = vadd.f32 %v2503, %v2511
          %v2543 = vadd.f32 %v2504, %v2511
          %v2544 = vadd.f32 %v2505, %v2511
          %2545 = vst [vmem:[%s367] sm:$0xff] %v2513
          %2546 = vst [vmem:[%s367 + $0x8] sm:$0xff] %v2514
          %2547 = vst [vmem:[%s367 + $0x10] sm:$0xff] %v2515
          %2548 = vst [vmem:[%s367 + $0x18] sm:$0xff] %v2516
          %2549 = vst [vmem:[%s367 + $0x20] sm:$0xff] %v2517
          %2550 = vst [vmem:[%s367 + $0x28] sm:$0xff] %v2518
          %2551 = vst [vmem:[%s367 + $0x30] sm:$0xff] %v2519
          %2552 = vst [vmem:[%s367 + $0x38] sm:$0xff] %v2520
          %2553 = vst [vmem:[%s367 + $0x40] sm:$0xff] %v2521
          %2554 = vst [vmem:[%s367 + $0x48] sm:$0xff] %v2522
          %2555 = vst [vmem:[%s367 + $0x50] sm:$0xff] %v2523
          %2556 = vst [vmem:[%s367 + $0x58] sm:$0xff] %v2524
          %2557 = vst [vmem:[%s367 + $0x60] sm:$0xff] %v2525
          %2558 = vst [vmem:[%s367 + $0x68] sm:$0xff] %v2526
          %2559 = vst [vmem:[%s367 + $0x70] sm:$0xff] %v2527
          %2560 = vst [vmem:[%s367 + $0x78] sm:$0xff] %v2528
          %2561 = vst [vmem:[%s367 + $0x80] sm:$0xff] %v2529
          %2562 = vst [vmem:[%s367 + $0x88] sm:$0xff] %v2530
          %2563 = vst [vmem:[%s367 + $0x90] sm:$0xff] %v2531
          %2564 = vst [vmem:[%s367 + $0x98] sm:$0xff] %v2532
          %2565 = vst [vmem:[%s367 + $0xa0] sm:$0xff] %v2533
          %2566 = vst [vmem:[%s367 + $0xa8] sm:$0xff] %v2534
          %2567 = vst [vmem:[%s367 + $0xb0] sm:$0xff] %v2535
          %2568 = vst [vmem:[%s367 + $0xb8] sm:$0xff] %v2536
          %2569 = vst [vmem:[%s367 + $0xc0] sm:$0xff] %v2537
          %2570 = vst [vmem:[%s367 + $0xc8] sm:$0xff] %v2538
          %2571 = vst [vmem:[%s367 + $0xd0] sm:$0xff] %v2539
          %2572 = vst [vmem:[%s367 + $0xd8] sm:$0xff] %v2540
          %2573 = vst [vmem:[%s367 + $0xe0] sm:$0xff] %v2541
          %2574 = vst [vmem:[%s367 + $0xe8] sm:$0xff] %v2542
          %2575 = vst [vmem:[%s367 + $0xf0] sm:$0xff] %v2543
          %2576 = vst [vmem:[%s367 + $0xf8] sm:$0xff] %v2544
        $region68: #{tpu_custom_call.1} parent=47 // pred_fallthru
          _
        %s2577 = sand.u32 %s212, 1
        %s2578 = scalar_lea.sflag [#allocation5], %s2577
        %s2579 = sand.u32 %s212, 1
        %s2580 = smul.addr %s2579, 256
        %s2581 = scalar_lea.vmem [#allocation9], %s2580
        // Predicated region
        $region69: #{tpu_custom_call.1} parent=47 // pred_check
          %p2582 = pneg %p222
        $region70: #{tpu_custom_call.1} parent=47 // pred_check_branch
          %2584 = sbr.rel (%p2582) target = $region72
        $region71: #{tpu_custom_call.1} parent=47 // pred_region
          %s2585 = smul.u32 32, %s29
          %s2587 = ssub.s32 4096, 4096
          %2588 = vsyncadd %s2578, %s2587
          %s2589 = smul.addr %s2585, 128
          %s2590 = scalar_lea.hbm %s7, %s2589
          %s2591 = sshll.u32 %s2581, 4
          %s2592 = int_to_ptr.vmem [resolvable:$true] %s2591
          %2597 = dma.vmem_to_hbm [thread:$0]  %s2592, 4096, %s2590, %s2578, 128, 128, 8
        $region72: #{tpu_custom_call.1} parent=47 // pred_fallthru
          _
      $region48: #{tpu_custom_call.1} parent=5 // pred_fallthru
        _
      %p2598 = scmp.le.s32.totalorder 2, %s20
      // Predicated region
      $region73: #{tpu_custom_call.1} parent=5 // pred_check
        %p2599 = pneg %p2598
      $region74: #{tpu_custom_call.1} parent=5 // pred_check_branch
        %2601 = sbr.rel (%p2599) target = $region76
      $region75: #{tpu_custom_call.1} parent=5 // pred_region
        %s2602 = ssub.s32 %s20, 2
        // Predicated region
        $region77: #{tpu_custom_call.1} parent=75 // pred_check
          %p2603 = pneg %p228
        $region78: #{tpu_custom_call.1} parent=75 // pred_check_branch
          %2605 = sbr.rel (%p2603) target = $region80
        $region79: #{tpu_custom_call.1} parent=75 // pred_region
          %s2606 = sand.u32 %s213, 1
          %s2607 = scalar_lea.sflag [#allocation5], %s2606
          %s2608 = sand.u32 %s213, 1
          %s2609 = smul.addr %s2608, 256
          %s2610 = scalar_lea.vmem [#allocation9], %s2609
          %2611 = dma.done %s2607, 4096
        $region80: #{tpu_custom_call.1} parent=75 // pred_fallthru
          _
      $region76: #{tpu_custom_call.1} parent=5 // pred_fallthru
        _
    $region6: #{tpu_custom_call.1} parent=1 // loop_footer
      %s24 = sadd.s32 1, %s20
    $region7: #{tpu_custom_call.1} parent=1 // loop_footer_branch
      %19 = sbr.rel target = $region3
    $region8: #{tpu_custom_call.1} parent=1 // loop_exit
      _
    %2612 = vsyncpa [#allocation4], 1
    %s2613 = scalar_lea.sflag [#allocation4], 1
    %2614 = vsyncpa %s2613, 1
    %2615 = vsyncpa [#allocation7], 1
    %2616 = vsyncpa [#allocation5], 1
    %s2617 = scalar_lea.sflag [#allocation5], 1
    %2618 = vsyncpa %s2617, 1

</llo_original>
